<compile_context>
chip_gen: v5e
topology: v5e:2x2
jax: 0.10.0
libtpu: 0.0.40
codegen_flags: <defaults>
</compile_context>

<pallas_src>
import functools
import math

import jax
import jax.numpy as jnp
from jax.experimental import pallas as pl
from jax.experimental.pallas import tpu as pltpu


# -----------------------------------------------------------------------------
# Fused ISAB kernel for one block of `bblk` batch elements.
# -----------------------------------------------------------------------------
def _isab_kernel(x_ref, q0h_ref, wx_ref, bx_ref, wo0_ref, wh_ref, bh_ref,
                 wo1_ref, bo_ref, o_ref, *, num_heads, lane_dense_out):
    bblk, n_x, dim_in = x_ref.shape            # (Bblk, N, dim_in)
    nh = num_heads
    ni, ds = q0h_ref.shape[1], q0h_ref.shape[2]  # num_inds, head dim
    dim_v = nh * ds
    scale = 1.0 / math.sqrt(dim_v)             # PyTorch scales by sqrt(dim_V), not sqrt(d_head)
    f32 = jnp.float32

    xf = x_ref[...].astype(f32).reshape(bblk * n_x, dim_in)   # flat M dim for the MXU

    def split_heads(t3, base):
        # t3: (bblk, n, C); take lanes [base+h*ds, base+(h+1)*ds) per head and
        # stack heads along the leading batch axis -> (nh*bblk, n, ds).
        return jnp.concatenate(
            [t3[:, :, base + h * ds: base + (h + 1) * ds] for h in range(nh)], axis=0)

    def merge_heads(t3):
        # (nh*bblk, n, ds) -> (bblk, n, dim_V)
        return jnp.concatenate([t3[h * bblk:(h + 1) * bblk] for h in range(nh)], axis=2)

    def attention(q_, k_, v_):
        # q_: (nh*bblk, nq, ds), k_/v_: (nh*bblk, nk, ds)
        s = jnp.einsum('bqd,bkd->bqk', q_, k_, preferred_element_type=f32) * scale
        s = s - jnp.max(s, axis=-1, keepdims=True)
        e = jnp.exp(s)
        p = e / jnp.sum(e, axis=-1, keepdims=True)   # exact f32 softmax (no approx vrcp)
        return q_ + jnp.einsum('bqk,bkd->bqd', p, v_, preferred_element_type=f32)

    # ---- fused projections with X as LHS: [K0 | V0 | Q1] in one MXU pass ----
    px = jnp.dot(xf, wx_ref[...], preferred_element_type=f32) + bx_ref[...].astype(f32)
    px3 = px.reshape(bblk, n_x, 3 * dim_v)

    # ---------------- MAB0: H = MAB(I, X) ----------------
    # Q projection of I is batch-independent -> precomputed & pre-split on host.
    q0h = q0h_ref[...].astype(f32)                         # (nh, ni, ds)
    if bblk == 1:
        q0_ = q0h
    else:
        q0_ = jnp.broadcast_to(q0h[:, None], (nh, bblk, ni, ds)).reshape(nh * bblk, ni, ds)
    k0_ = split_heads(px3, 0)
    v0_ = split_heads(px3, dim_v)
    o0 = merge_heads(attention(q0_, k0_, v0_)).reshape(bblk * ni, dim_v)
    bo0 = bo_ref[0:1, :].astype(f32)
    hf = o0 + jnp.maximum(jnp.dot(o0, wo0_ref[...], preferred_element_type=f32) + bo0, 0.0)
    # hf: (Bblk*num_inds, dim_V) -- the induced representation H, kept on-chip.

    # ---- fused projections with H as LHS: [K1 | V1] in one MXU pass ----
    ph = jnp.dot(hf, wh_ref[...], preferred_element_type=f32) + bh_ref[...].astype(f32)
    ph3 = ph.reshape(bblk, ni, 2 * dim_v)

    # ---------------- MAB1: out = MAB(X, H) ----------------
    q1_ = split_heads(px3, 2 * dim_v)
    k1_ = split_heads(ph3, 0)
    v1_ = split_heads(ph3, dim_v)
    o1 = merge_heads(attention(q1_, k1_, v1_)).reshape(bblk * n_x, dim_v)
    bo1 = bo_ref[1:2, :].astype(f32)
    out = o1 + jnp.maximum(jnp.dot(o1, wo1_ref[...], preferred_element_type=f32) + bo1, 0.0)

    if lane_dense_out:
        # A/B lever from the review: one lane-dense (N*dim_V >= 128) slab per step.
        o_ref[...] = out.reshape(bblk, n_x * dim_v).astype(o_ref.dtype)
    else:
        o_ref[...] = out.reshape(bblk, n_x, dim_v).astype(o_ref.dtype)


# -----------------------------------------------------------------------------
# Host-side helpers.
# -----------------------------------------------------------------------------
def pack_isab_params(I_param, mab0_params, mab1_params, num_heads):
    """One-time weight/bias packing (do NOT call per forward step)."""
    p0, p1 = mab0_params, mab1_params
    dim_v = p0["wq"].shape[0]
    assert dim_v % num_heads == 0
    ds = dim_v // num_heads

    I2 = I_param[0].astype(jnp.float32)                     # (num_inds, dim_out)
    q0 = I2 @ p0["wq"].T + p0["bq"]                         # (num_inds, dim_V), batch-independent
    ni = q0.shape[0]
    q0h = q0.reshape(ni, num_heads, ds).transpose(1, 0, 2)  # (nh, num_inds, ds), pre-split heads

    wx = jnp.concatenate([p0["wk"].T, p0["wv"].T, p1["wq"].T], axis=1)   # (dim_in, 3*dim_V)
    bx = jnp.concatenate([p0["bk"], p0["bv"], p1["bq"]])[None, :]        # (1, 3*dim_V)
    wh = jnp.concatenate([p1["wk"].T, p1["wv"].T], axis=1)               # (dim_V, 2*dim_V)
    bh = jnp.concatenate([p1["bk"], p1["bv"]])[None, :]                  # (1, 2*dim_V)
    bo = jnp.stack([p0["bo"], p1["bo"]], axis=0)                         # (2, dim_V)

    return dict(q0h=q0h, wx=wx, bx=bx, wo0=p0["wo"].T, wh=wh, bh=bh,
                wo1=p1["wo"].T, bo=bo)


def _per_step_vmem_bytes(bblk, n, dim_in, dim_v, num_inds, nh):
    """Crude upper bound on live f32 bytes per grid step (excl. resident weights)."""
    words = (2 * bblk * n * dim_in            # X block (double-buffered)
             + 2 * bblk * n * dim_v           # out block (double-buffered)
             + bblk * n * 3 * dim_v           # fused X projections
             + bblk * num_inds * 2 * dim_v    # fused H projections
             + 4 * bblk * n * dim_v           # head splits / attn out / fc_o (MAB1)
             + 4 * bblk * num_inds * dim_v    # head splits / attn out / fc_o (MAB0)
             + 2 * nh * bblk * n * num_inds)  # score / prob matrices
    return 4 * words


def _resident_spec(a):
    """Constant index_map -> fetched once, resident in VMEM across the whole grid."""
    nd = a.ndim
    return pl.BlockSpec(a.shape, lambda i, _nd=nd: (0,) * _nd)


def isab_forward(X, packed, num_heads, *, max_batch_block=64, lane_dense_out=False,
                 vmem_budget_bytes=12 * 1024 * 1024,
                 vmem_limit_bytes=40 * 1024 * 1024):
    """ISAB forward: MAB1(X, MAB0(I, X)) as one fused Pallas kernel over batch blocks."""
    B, N, dim_in = X.shape
    nh = num_heads
    q0h = packed["q0h"]
    ni, ds = q0h.shape[1], q0h.shape[2]
    dim_v = nh * ds

    # --- batch-block selection ------------------------------------------------
    # Big blocks amortize per-step overhead; capped by a VMEM-footprint budget
    # that is safe on v7x (64 MiB physical VMEM) as well as v5e/v6e (128 MiB).
    per_elem = _per_step_vmem_bytes(1, N, dim_in, dim_v, ni, nh)
    bblk = max(1, min(B, max_batch_block, vmem_budget_bytes // max(per_elem, 1)))
    if B >= 2:
        bblk = min(bblk, (B + 1) // 2)   # >= 2 grid steps so v7x uses both TensorCores
    B_pad = -(-B // bblk) * bblk         # pad non-divisible B (cheap, sliced off below)
    if B_pad != B:
        X = jnp.pad(X, ((0, B_pad - B), (0, 0), (0, 0)))
    grid = (B_pad // bblk,)

    kernel = functools.partial(_isab_kernel, num_heads=nh, lane_dense_out=lane_dense_out)

    if lane_dense_out:
        out_shape = jax.ShapeDtypeStruct((B_pad, N * dim_v), X.dtype)
        out_spec = pl.BlockSpec((bblk, N * dim_v), lambda i: (i, 0))
    else:
        out_shape = jax.ShapeDtypeStruct((B_pad, N, dim_v), X.dtype)
        out_spec = pl.BlockSpec((bblk, N, dim_v), lambda i: (i, 0, 0))

    operands = (X, packed["q0h"], packed["wx"], packed["bx"], packed["wo0"],
                packed["wh"], packed["bh"], packed["wo1"], packed["bo"])
    in_specs = [pl.BlockSpec((bblk, N, dim_in), lambda i: (i, 0, 0))]
    in_specs += [_resident_spec(a) for a in operands[1:]]

    out = pl.pallas_call(
        kernel,
        out_shape=out_shape,
        grid=grid,
        in_specs=in_specs,
        out_specs=out_spec,
        compiler_params=pltpu.CompilerParams(
            dimension_semantics=("parallel",),
            # > default scoped VMEM (16 MiB on v5e, 32 MiB on v6e/v7x), safely
            # below v7x's 64 MiB physical VMEM.
            vmem_limit_bytes=vmem_limit_bytes),
    )(*operands)

    if lane_dense_out:
        out = out.reshape(B_pad, N, dim_v)
    return out[:B]


# -----------------------------------------------------------------------------
# Pure-JAX reference (mirrors the PyTorch code) for verification.
# -----------------------------------------------------------------------------
def _mab_ref(Q, K, p, num_heads):
    dim_v = p["wq"].shape[0]
    Qp = Q @ p["wq"].T + p["bq"]
    Kp = K @ p["wk"].T + p["bk"]
    Vp = K @ p["wv"].T + p["bv"]
    Q_ = jnp.concatenate(jnp.split(Qp, num_heads, axis=2), axis=0)
    K_ = jnp.concatenate(jnp.split(Kp, num_heads, axis=2), axis=0)
    V_ = jnp.concatenate(jnp.split(Vp, num_heads, axis=2), axis=0)
    A = jax.nn.softmax(jnp.einsum("bqd,bkd->bqk", Q_, K_) / math.sqrt(dim_v), axis=2)
    O = Q_ + jnp.einsum("bqk,bkd->bqd", A, V_)
    O = jnp.concatenate(jnp.split(O, num_heads, axis=0), axis=2)
    return O + jax.nn.relu(O @ p["wo"].T + p["bo"])


def _isab_ref(X, I_param, p0, p1, num_heads):
    B = X.shape[0]
    I_rep = jnp.broadcast_to(I_param, (B,) + I_param.shape[1:])
    H = _mab_ref(I_rep, X, p0, num_heads)
    return _mab_ref(X, H, p1, num_heads)


# -----------------------------------------------------------------------------
# Deterministic parameter init (shapes follow the PyTorch __init__).
# -----------------------------------------------------------------------------
def _init_linear(key, in_dim, out_dim):
    kw, kb = jax.random.split(key)
    bound = 1.0 / math.sqrt(in_dim)
    w = jax.random.uniform(kw, (out_dim, in_dim), jnp.float32, -bound, bound)
    b = jax.random.uniform(kb, (out_dim,), jnp.float32, -bound, bound)
    return w, b


def _init_mab(key, dim_Q, dim_K, dim_V):
    keys = jax.random.split(key, 4)
    wq, bq = _init_linear(keys[0], dim_Q, dim_V)
    wk, bk = _init_linear(keys[1], dim_K, dim_V)
    wv, bv = _init_linear(keys[2], dim_K, dim_V)
    wo, bo = _init_linear(keys[3], dim_V, dim_V)
    return dict(wq=wq, bq=bq, wk=wk, bk=bk, wv=wv, bv=bv, wo=wo, bo=bo)


if __name__ == "__main__":
    # ISAB(dim_in=8, dim_out=32, num_heads=4, num_inds=8, ln=False)
    dim_in, dim_out, num_heads, num_inds = 8, 32, 4, 8
    B, N = 2, 16

    root = jax.random.PRNGKey(0)
    k_i, k_m0, k_m1, k_x = jax.random.split(root, 4)

    lim = math.sqrt(6.0 / (num_inds + dim_out))
    I_param = jax.random.uniform(k_i, (1, num_inds, dim_out), jnp.float32, -lim, lim)

    mab0_params = _init_mab(k_m0, dim_out, dim_in, dim_out)   # MAB(dim_out, dim_in, dim_out)
    mab1_params = _init_mab(k_m1, dim_in, dim_out, dim_out)   # MAB(dim_in, dim_out, dim_out)

    X = jax.random.normal(k_x, (B, N, dim_in), jnp.float32)

    packed = pack_isab_params(I_param, mab0_params, mab1_params, num_heads)  # once, not per call
    out = isab_forward(X, packed, num_heads)
    out = jax.block_until_ready(out)
    assert out.shape == (B, N, dim_out)

    # Verification: softmax is now exact f32 (no approx vrcp), so the only
    # remaining difference vs. the XLA reference is MXU matmul pass-precision.
    # Use an adaptive tolerance: floor 1e-4, scaled by the reference's own
    # sensitivity to matmul precision (highest vs default) on this platform.
    with jax.default_matmul_precision("highest"):
        ref_hi = _isab_ref(X, I_param, mab0_params, mab1_params, num_heads)
    ref_lo = _isab_ref(X, I_param, mab0_params, mab1_params, num_heads)
    sens = float(jnp.max(jnp.abs(ref_hi - ref_lo)))
    tol = max(1e-4, 8.0 * sens)
    assert jnp.allclose(out, ref_hi, atol=tol, rtol=tol), "mismatch vs JAX reference"

    print("KERNEL_OK")
</pallas_src>

<mosaic_0001>
module attributes {stable_mosaic.version = 11 : i64} {
  func.func @_isab_kernel(%arg0: i32, %arg1: memref<1x16x8xf32, #tpu.memory_space<vmem>>, %arg2: memref<4x8x8xf32, #tpu.memory_space<vmem>>, %arg3: memref<8x96xf32, #tpu.memory_space<vmem>>, %arg4: memref<1x96xf32, #tpu.memory_space<vmem>>, %arg5: memref<32x32xf32, #tpu.memory_space<vmem>>, %arg6: memref<32x64xf32, #tpu.memory_space<vmem>>, %arg7: memref<1x64xf32, #tpu.memory_space<vmem>>, %arg8: memref<32x32xf32, #tpu.memory_space<vmem>>, %arg9: memref<2x32xf32, #tpu.memory_space<vmem>>, %arg10: memref<1x16x32xf32, #tpu.memory_space<vmem>>) attributes {dimension_semantics = [#tpu.dimension_semantics<parallel>], iteration_bounds = array<i64: 2>, scalar_prefetch = 0 : i64, scratch_operands = 0 : i64, tpu.core_type = #tpu.core_type<tc>, window_params = [{transform_indices = @transform_0, window_bounds = array<i64: 1, 16, 8>}, {pipeline_mode = #tpu.pipeline_mode<synchronous>, transform_indices = @transform_1, window_bounds = array<i64: 4, 8, 8>}, {pipeline_mode = #tpu.pipeline_mode<synchronous>, transform_indices = @transform_2, window_bounds = array<i64: 8, 96>}, {pipeline_mode = #tpu.pipeline_mode<synchronous>, transform_indices = @transform_3, window_bounds = array<i64: 1, 96>}, {pipeline_mode = #tpu.pipeline_mode<synchronous>, transform_indices = @transform_4, window_bounds = array<i64: 32, 32>}, {pipeline_mode = #tpu.pipeline_mode<synchronous>, transform_indices = @transform_5, window_bounds = array<i64: 32, 64>}, {pipeline_mode = #tpu.pipeline_mode<synchronous>, transform_indices = @transform_6, window_bounds = array<i64: 1, 64>}, {pipeline_mode = #tpu.pipeline_mode<synchronous>, transform_indices = @transform_7, window_bounds = array<i64: 32, 32>}, {pipeline_mode = #tpu.pipeline_mode<synchronous>, transform_indices = @transform_8, window_bounds = array<i64: 2, 32>}, {transform_indices = @transform_9, window_bounds = array<i64: 1, 16, 32>}]} {
    %c0 = arith.constant 0 : index
    %c0_0 = arith.constant 0 : index
    %c0_1 = arith.constant 0 : index
    %0 = vector.load %arg1[%c0, %c0_0, %c0_1] : memref<1x16x8xf32, #tpu.memory_space<vmem>>, vector<1x16x8xf32>
    %1 = vector.shape_cast %0 : vector<1x16x8xf32> to vector<16x8xf32>
    %c0_2 = arith.constant 0 : index
    %c0_3 = arith.constant 0 : index
    %2 = vector.load %arg3[%c0_2, %c0_3] : memref<8x96xf32, #tpu.memory_space<vmem>>, vector<8x96xf32>
    %cst = arith.constant dense<0.000000e+00> : vector<16x96xf32>
    %3 = tpu.matmul %1, %2, %cst {dimension_numbers = #tpu.dot_dimension_numbers<[1], [0], [0], [1], [0, 0, 1, 1], [], []>} : vector<16x8xf32>, vector<8x96xf32>, vector<16x96xf32> -> vector<16x96xf32>
    %c0_4 = arith.constant 0 : index
    %c0_5 = arith.constant 0 : index
    %4 = vector.load %arg4[%c0_4, %c0_5] : memref<1x96xf32, #tpu.memory_space<vmem>>, vector<1x96xf32>
    %5 = vector.broadcast %4 : vector<1x96xf32> to vector<16x96xf32>
    %6 = arith.addf %3, %5 : vector<16x96xf32>
    %7 = vector.shape_cast %6 : vector<16x96xf32> to vector<1x16x96xf32>
    %c0_6 = arith.constant 0 : index
    %c0_7 = arith.constant 0 : index
    %c0_8 = arith.constant 0 : index
    %8 = vector.load %arg2[%c0_6, %c0_7, %c0_8] : memref<4x8x8xf32, #tpu.memory_space<vmem>>, vector<4x8x8xf32>
    %9 = vector.extract_strided_slice %7 {offsets = [0, 0, 0], sizes = [1, 16, 8], strides = [1, 1, 1]} : vector<1x16x96xf32> to vector<1x16x8xf32>
    %10 = vector.extract_strided_slice %7 {offsets = [0, 0, 8], sizes = [1, 16, 8], strides = [1, 1, 1]} : vector<1x16x96xf32> to vector<1x16x8xf32>
    %11 = vector.extract_strided_slice %7 {offsets = [0, 0, 16], sizes = [1, 16, 8], strides = [1, 1, 1]} : vector<1x16x96xf32> to vector<1x16x8xf32>
    %12 = vector.extract_strided_slice %7 {offsets = [0, 0, 24], sizes = [1, 16, 8], strides = [1, 1, 1]} : vector<1x16x96xf32> to vector<1x16x8xf32>
    %13 = tpu.concatenate %9, %10, %11, %12 in 0 : vector<1x16x8xf32>, vector<1x16x8xf32>, vector<1x16x8xf32>, vector<1x16x8xf32> -> vector<4x16x8xf32>
    %14 = vector.extract_strided_slice %7 {offsets = [0, 0, 32], sizes = [1, 16, 8], strides = [1, 1, 1]} : vector<1x16x96xf32> to vector<1x16x8xf32>
    %15 = vector.extract_strided_slice %7 {offsets = [0, 0, 40], sizes = [1, 16, 8], strides = [1, 1, 1]} : vector<1x16x96xf32> to vector<1x16x8xf32>
    %16 = vector.extract_strided_slice %7 {offsets = [0, 0, 48], sizes = [1, 16, 8], strides = [1, 1, 1]} : vector<1x16x96xf32> to vector<1x16x8xf32>
    %17 = vector.extract_strided_slice %7 {offsets = [0, 0, 56], sizes = [1, 16, 8], strides = [1, 1, 1]} : vector<1x16x96xf32> to vector<1x16x8xf32>
    %18 = tpu.concatenate %14, %15, %16, %17 in 0 : vector<1x16x8xf32>, vector<1x16x8xf32>, vector<1x16x8xf32>, vector<1x16x8xf32> -> vector<4x16x8xf32>
    "tpu.trace_start"() <{level = 10 : i32, message = "bqd,bkd->bqk"}> : () -> ()
    %cst_9 = arith.constant dense<0.000000e+00> : vector<4x8x16xf32>
    %19 = tpu.matmul %8, %13, %cst_9 {dimension_numbers = #tpu.dot_dimension_numbers<[2], [2], [1], [1], [0, 0, 0, 1, 1, 1], [0], [0]>} : vector<4x8x8xf32>, vector<4x16x8xf32>, vector<4x8x16xf32> -> vector<4x8x16xf32>
    "tpu.trace_stop"() : () -> ()
    %cst_10 = arith.constant 0.176776692 : f32
    %20 = vector.broadcast %cst_10 : f32 to vector<4x8x16xf32>
    %21 = arith.mulf %19, %20 : vector<4x8x16xf32>
    %cst_11 = arith.constant dense<0xFF800000> : vector<4x8xf32>
    %22 = vector.multi_reduction <maximumf>, %21, %cst_11 [2] : vector<4x8x16xf32> to vector<4x8xf32>
    %23 = vector.shape_cast %22 : vector<4x8xf32> to vector<4x8x1xf32>
    %24 = vector.broadcast %23 : vector<4x8x1xf32> to vector<4x8x16xf32>
    %25 = arith.subf %21, %24 : vector<4x8x16xf32>
    %26 = math.exp %25 : vector<4x8x16xf32>
    %cst_12 = arith.constant dense<0.000000e+00> : vector<4x8xf32>
    %27 = vector.multi_reduction <add>, %26, %cst_12 [2] : vector<4x8x16xf32> to vector<4x8xf32>
    %28 = vector.shape_cast %27 : vector<4x8xf32> to vector<4x8x1xf32>
    %29 = vector.broadcast %28 : vector<4x8x1xf32> to vector<4x8x16xf32>
    %30 = arith.divf %26, %29 : vector<4x8x16xf32>
    "tpu.trace_start"() <{level = 10 : i32, message = "bqk,bkd->bqd"}> : () -> ()
    %cst_13 = arith.constant dense<0.000000e+00> : vector<4x8x8xf32>
    %31 = tpu.matmul %30, %18, %cst_13 {dimension_numbers = #tpu.dot_dimension_numbers<[2], [1], [1], [2], [0, 0, 0, 1, 1, 2], [0], [0]>} : vector<4x8x16xf32>, vector<4x16x8xf32>, vector<4x8x8xf32> -> vector<4x8x8xf32>
    "tpu.trace_stop"() : () -> ()
    %32 = arith.addf %8, %31 : vector<4x8x8xf32>
    %33 = vector.extract_strided_slice %32 {offsets = [0, 0, 0], sizes = [1, 8, 8], strides = [1, 1, 1]} : vector<4x8x8xf32> to vector<1x8x8xf32>
    %34 = vector.extract_strided_slice %32 {offsets = [1, 0, 0], sizes = [1, 8, 8], strides = [1, 1, 1]} : vector<4x8x8xf32> to vector<1x8x8xf32>
    %35 = vector.extract_strided_slice %32 {offsets = [2, 0, 0], sizes = [1, 8, 8], strides = [1, 1, 1]} : vector<4x8x8xf32> to vector<1x8x8xf32>
    %36 = vector.extract_strided_slice %32 {offsets = [3, 0, 0], sizes = [1, 8, 8], strides = [1, 1, 1]} : vector<4x8x8xf32> to vector<1x8x8xf32>
    %37 = tpu.concatenate %33, %34, %35, %36 in 2 : vector<1x8x8xf32>, vector<1x8x8xf32>, vector<1x8x8xf32>, vector<1x8x8xf32> -> vector<1x8x32xf32>
    %38 = vector.shape_cast %37 : vector<1x8x32xf32> to vector<8x32xf32>
    %c0_14 = arith.constant 0 : index
    %c0_15 = arith.constant 0 : index
    %39 = vector.load %arg9[%c0_14, %c0_15] : memref<2x32xf32, #tpu.memory_space<vmem>>, vector<1x32xf32>
    %c0_16 = arith.constant 0 : index
    %c0_17 = arith.constant 0 : index
    %40 = vector.load %arg5[%c0_16, %c0_17] : memref<32x32xf32, #tpu.memory_space<vmem>>, vector<32x32xf32>
    %cst_18 = arith.constant dense<0.000000e+00> : vector<8x32xf32>
    %41 = tpu.matmul %38, %40, %cst_18 {dimension_numbers = #tpu.dot_dimension_numbers<[1], [0], [0], [1], [0, 0, 1, 1], [], []>} : vector<8x32xf32>, vector<32x32xf32>, vector<8x32xf32> -> vector<8x32xf32>
    %42 = vector.broadcast %39 : vector<1x32xf32> to vector<8x32xf32>
    %43 = arith.addf %41, %42 : vector<8x32xf32>
    %cst_19 = arith.constant 0.000000e+00 : f32
    %44 = vector.broadcast %cst_19 : f32 to vector<8x32xf32>
    %45 = arith.maximumf %43, %44 : vector<8x32xf32>
    %46 = arith.addf %38, %45 : vector<8x32xf32>
    %c0_20 = arith.constant 0 : index
    %c0_21 = arith.constant 0 : index
    %47 = vector.load %arg6[%c0_20, %c0_21] : memref<32x64xf32, #tpu.memory_space<vmem>>, vector<32x64xf32>
    %cst_22 = arith.constant dense<0.000000e+00> : vector<8x64xf32>
    %48 = tpu.matmul %46, %47, %cst_22 {dimension_numbers = #tpu.dot_dimension_numbers<[1], [0], [0], [1], [0, 0, 1, 1], [], []>} : vector<8x32xf32>, vector<32x64xf32>, vector<8x64xf32> -> vector<8x64xf32>
    %c0_23 = arith.constant 0 : index
    %c0_24 = arith.constant 0 : index
    %49 = vector.load %arg7[%c0_23, %c0_24] : memref<1x64xf32, #tpu.memory_space<vmem>>, vector<1x64xf32>
    %50 = vector.broadcast %49 : vector<1x64xf32> to vector<8x64xf32>
    %51 = arith.addf %48, %50 : vector<8x64xf32>
    %52 = vector.shape_cast %51 : vector<8x64xf32> to vector<1x8x64xf32>
    %53 = vector.extract_strided_slice %7 {offsets = [0, 0, 64], sizes = [1, 16, 8], strides = [1, 1, 1]} : vector<1x16x96xf32> to vector<1x16x8xf32>
    %54 = vector.extract_strided_slice %7 {offsets = [0, 0, 72], sizes = [1, 16, 8], strides = [1, 1, 1]} : vector<1x16x96xf32> to vector<1x16x8xf32>
    %55 = vector.extract_strided_slice %7 {offsets = [0, 0, 80], sizes = [1, 16, 8], strides = [1, 1, 1]} : vector<1x16x96xf32> to vector<1x16x8xf32>
    %56 = vector.extract_strided_slice %7 {offsets = [0, 0, 88], sizes = [1, 16, 8], strides = [1, 1, 1]} : vector<1x16x96xf32> to vector<1x16x8xf32>
    %57 = tpu.concatenate %53, %54, %55, %56 in 0 : vector<1x16x8xf32>, vector<1x16x8xf32>, vector<1x16x8xf32>, vector<1x16x8xf32> -> vector<4x16x8xf32>
    %58 = vector.extract_strided_slice %52 {offsets = [0, 0, 0], sizes = [1, 8, 8], strides = [1, 1, 1]} : vector<1x8x64xf32> to vector<1x8x8xf32>
    %59 = vector.extract_strided_slice %52 {offsets = [0, 0, 8], sizes = [1, 8, 8], strides = [1, 1, 1]} : vector<1x8x64xf32> to vector<1x8x8xf32>
    %60 = vector.extract_strided_slice %52 {offsets = [0, 0, 16], sizes = [1, 8, 8], strides = [1, 1, 1]} : vector<1x8x64xf32> to vector<1x8x8xf32>
    %61 = vector.extract_strided_slice %52 {offsets = [0, 0, 24], sizes = [1, 8, 8], strides = [1, 1, 1]} : vector<1x8x64xf32> to vector<1x8x8xf32>
    %62 = tpu.concatenate %58, %59, %60, %61 in 0 : vector<1x8x8xf32>, vector<1x8x8xf32>, vector<1x8x8xf32>, vector<1x8x8xf32> -> vector<4x8x8xf32>
    %63 = vector.extract_strided_slice %52 {offsets = [0, 0, 32], sizes = [1, 8, 8], strides = [1, 1, 1]} : vector<1x8x64xf32> to vector<1x8x8xf32>
    %64 = vector.extract_strided_slice %52 {offsets = [0, 0, 40], sizes = [1, 8, 8], strides = [1, 1, 1]} : vector<1x8x64xf32> to vector<1x8x8xf32>
    %65 = vector.extract_strided_slice %52 {offsets = [0, 0, 48], sizes = [1, 8, 8], strides = [1, 1, 1]} : vector<1x8x64xf32> to vector<1x8x8xf32>
    %66 = vector.extract_strided_slice %52 {offsets = [0, 0, 56], sizes = [1, 8, 8], strides = [1, 1, 1]} : vector<1x8x64xf32> to vector<1x8x8xf32>
    %67 = tpu.concatenate %63, %64, %65, %66 in 0 : vector<1x8x8xf32>, vector<1x8x8xf32>, vector<1x8x8xf32>, vector<1x8x8xf32> -> vector<4x8x8xf32>
    "tpu.trace_start"() <{level = 10 : i32, message = "bqd,bkd->bqk"}> : () -> ()
    %cst_25 = arith.constant dense<0.000000e+00> : vector<4x16x8xf32>
    %68 = tpu.matmul %57, %62, %cst_25 {dimension_numbers = #tpu.dot_dimension_numbers<[2], [2], [1], [1], [0, 0, 0, 1, 1, 1], [0], [0]>} : vector<4x16x8xf32>, vector<4x8x8xf32>, vector<4x16x8xf32> -> vector<4x16x8xf32>
    "tpu.trace_stop"() : () -> ()
    %cst_26 = arith.constant 0.176776692 : f32
    %69 = vector.broadcast %cst_26 : f32 to vector<4x16x8xf32>
    %70 = arith.mulf %68, %69 : vector<4x16x8xf32>
    %cst_27 = arith.constant dense<0xFF800000> : vector<4x16xf32>
    %71 = vector.multi_reduction <maximumf>, %70, %cst_27 [2] : vector<4x16x8xf32> to vector<4x16xf32>
    %72 = vector.shape_cast %71 : vector<4x16xf32> to vector<4x16x1xf32>
    %73 = vector.broadcast %72 : vector<4x16x1xf32> to vector<4x16x8xf32>
    %74 = arith.subf %70, %73 : vector<4x16x8xf32>
    %75 = math.exp %74 : vector<4x16x8xf32>
    %cst_28 = arith.constant dense<0.000000e+00> : vector<4x16xf32>
    %76 = vector.multi_reduction <add>, %75, %cst_28 [2] : vector<4x16x8xf32> to vector<4x16xf32>
    %77 = vector.shape_cast %76 : vector<4x16xf32> to vector<4x16x1xf32>
    %78 = vector.broadcast %77 : vector<4x16x1xf32> to vector<4x16x8xf32>
    %79 = arith.divf %75, %78 : vector<4x16x8xf32>
    "tpu.trace_start"() <{level = 10 : i32, message = "bqk,bkd->bqd"}> : () -> ()
    %cst_29 = arith.constant dense<0.000000e+00> : vector<4x16x8xf32>
    %80 = tpu.matmul %79, %67, %cst_29 {dimension_numbers = #tpu.dot_dimension_numbers<[2], [1], [1], [2], [0, 0, 0, 1, 1, 2], [0], [0]>} : vector<4x16x8xf32>, vector<4x8x8xf32>, vector<4x16x8xf32> -> vector<4x16x8xf32>
    "tpu.trace_stop"() : () -> ()
    %81 = arith.addf %57, %80 : vector<4x16x8xf32>
    %82 = vector.extract_strided_slice %81 {offsets = [0, 0, 0], sizes = [1, 16, 8], strides = [1, 1, 1]} : vector<4x16x8xf32> to vector<1x16x8xf32>
    %83 = vector.extract_strided_slice %81 {offsets = [1, 0, 0], sizes = [1, 16, 8], strides = [1, 1, 1]} : vector<4x16x8xf32> to vector<1x16x8xf32>
    %84 = vector.extract_strided_slice %81 {offsets = [2, 0, 0], sizes = [1, 16, 8], strides = [1, 1, 1]} : vector<4x16x8xf32> to vector<1x16x8xf32>
    %85 = vector.extract_strided_slice %81 {offsets = [3, 0, 0], sizes = [1, 16, 8], strides = [1, 1, 1]} : vector<4x16x8xf32> to vector<1x16x8xf32>
    %86 = tpu.concatenate %82, %83, %84, %85 in 2 : vector<1x16x8xf32>, vector<1x16x8xf32>, vector<1x16x8xf32>, vector<1x16x8xf32> -> vector<1x16x32xf32>
    %87 = vector.shape_cast %86 : vector<1x16x32xf32> to vector<16x32xf32>
    %c1 = arith.constant 1 : index
    %c0_30 = arith.constant 0 : index
    %88 = vector.load %arg9[%c1, %c0_30] : memref<2x32xf32, #tpu.memory_space<vmem>>, vector<1x32xf32>
    %c0_31 = arith.constant 0 : index
    %c0_32 = arith.constant 0 : index
    %89 = vector.load %arg8[%c0_31, %c0_32] : memref<32x32xf32, #tpu.memory_space<vmem>>, vector<32x32xf32>
    %cst_33 = arith.constant dense<0.000000e+00> : vector<16x32xf32>
    %90 = tpu.matmul %87, %89, %cst_33 {dimension_numbers = #tpu.dot_dimension_numbers<[1], [0], [0], [1], [0, 0, 1, 1], [], []>} : vector<16x32xf32>, vector<32x32xf32>, vector<16x32xf32> -> vector<16x32xf32>
    %91 = vector.broadcast %88 : vector<1x32xf32> to vector<16x32xf32>
    %92 = arith.addf %90, %91 : vector<16x32xf32>
    %cst_34 = arith.constant 0.000000e+00 : f32
    %93 = vector.broadcast %cst_34 : f32 to vector<16x32xf32>
    %94 = arith.maximumf %92, %93 : vector<16x32xf32>
    %95 = arith.addf %87, %94 : vector<16x32xf32>
    %96 = vector.shape_cast %95 : vector<16x32xf32> to vector<1x16x32xf32>
    %c0_35 = arith.constant 0 : index
    %c0_36 = arith.constant 0 : index
    %c0_37 = arith.constant 0 : index
    %97 = vector.load %arg10[%c0_35, %c0_36, %c0_37] : memref<1x16x32xf32, #tpu.memory_space<vmem>>, vector<1x16x32xf32>
    tpu.vector_store %arg10[%c0_35, %c0_36, %c0_37], %96 {strides = array<i32>} : memref<1x16x32xf32, #tpu.memory_space<vmem>>, vector<1x16x32xf32>,
    return
  }
  func.func @transform_0(%arg0: i32) -> (i32, i32, i32) {
    %c0_i32 = arith.constant 0 : i32
    %c0_i32_0 = arith.constant 0 : i32
    %c0_i32_1 = arith.constant 0 : i32
    return %arg0, %c0_i32, %c0_i32_0 : i32, i32, i32
  }
  func.func @transform_1(%arg0: i32) -> (i32, i32, i32) {
    %c0_i32 = arith.constant 0 : i32
    %c0_i32_0 = arith.constant 0 : i32
    %c0_i32_1 = arith.constant 0 : i32
    %c0_i32_2 = arith.constant 0 : i32
    return %c0_i32, %c0_i32_0, %c0_i32_1 : i32, i32, i32
  }
  func.func @transform_2(%arg0: i32) -> (i32, i32) {
    %c0_i32 = arith.constant 0 : i32
    %c0_i32_0 = arith.constant 0 : i32
    %c0_i32_1 = arith.constant 0 : i32
    return %c0_i32, %c0_i32_0 : i32, i32
  }
  func.func @transform_3(%arg0: i32) -> (i32, i32) {
    %c0_i32 = arith.constant 0 : i32
    %c0_i32_0 = arith.constant 0 : i32
    %c0_i32_1 = arith.constant 0 : i32
    return %c0_i32, %c0_i32_0 : i32, i32
  }
  func.func @transform_4(%arg0: i32) -> (i32, i32) {
    %c0_i32 = arith.constant 0 : i32
    %c0_i32_0 = arith.constant 0 : i32
    %c0_i32_1 = arith.constant 0 : i32
    return %c0_i32, %c0_i32_0 : i32, i32
  }
  func.func @transform_5(%arg0: i32) -> (i32, i32) {
    %c0_i32 = arith.constant 0 : i32
    %c0_i32_0 = arith.constant 0 : i32
    %c0_i32_1 = arith.constant 0 : i32
    return %c0_i32, %c0_i32_0 : i32, i32
  }
  func.func @transform_6(%arg0: i32) -> (i32, i32) {
    %c0_i32 = arith.constant 0 : i32
    %c0_i32_0 = arith.constant 0 : i32
    %c0_i32_1 = arith.constant 0 : i32
    return %c0_i32, %c0_i32_0 : i32, i32
  }
  func.func @transform_7(%arg0: i32) -> (i32, i32) {
    %c0_i32 = arith.constant 0 : i32
    %c0_i32_0 = arith.constant 0 : i32
    %c0_i32_1 = arith.constant 0 : i32
    return %c0_i32, %c0_i32_0 : i32, i32
  }
  func.func @transform_8(%arg0: i32) -> (i32, i32) {
    %c0_i32 = arith.constant 0 : i32
    %c0_i32_0 = arith.constant 0 : i32
    %c0_i32_1 = arith.constant 0 : i32
    return %c0_i32, %c0_i32_0 : i32, i32
  }
  func.func @transform_9(%arg0: i32) -> (i32, i32, i32) {
    %c0_i32 = arith.constant 0 : i32
    %c0_i32_0 = arith.constant 0 : i32
    %c0_i32_1 = arith.constant 0 : i32
    return %arg0, %c0_i32, %c0_i32_0 : i32, i32, i32
  }
}

</mosaic_0001>

<llo_original>
// kernel: tpu_custom_call.1
$region0: #{tpu_custom_call.1}
  #allocation0 [shape = 'u32[]', space=smem, size = 0x4, offset = 0x4, fixed_abs, tag = 'smem constant byte address 0x4 - core index']
  #allocation1 [shape = 'u32[72,128]{1,0:T(1,128)}', space=vmem, size = 0x9000, scoped, tag = 'internal scratch']
  %s0 = inlined_call_operand.vmem [shape: f32[2,16,8], index: 0, kind: input, shape index: {}]
  %s1 = inlined_call_operand.vmem [shape: f32[4,8,8], index: 1, kind: input, shape index: {}]
  %s2 = inlined_call_operand.vmem [shape: f32[8,96], index: 2, kind: input, shape index: {}]
  %s3 = inlined_call_operand.vmem [shape: f32[1,96], index: 3, kind: input, shape index: {}]
  %s4 = inlined_call_operand.hbm [shape: f32[32,32], index: 4, kind: input, shape index: {}]
  %s5 = inlined_call_operand.hbm [shape: f32[32,64], index: 5, kind: input, shape index: {}]
  %s6 = inlined_call_operand.vmem [shape: f32[1,64], index: 6, kind: input, shape index: {}]
  %s7 = inlined_call_operand.hbm [shape: f32[32,32], index: 7, kind: input, shape index: {}]
  %s8 = inlined_call_operand.vmem [shape: f32[2,32], index: 8, kind: input, shape index: {}]
  %s9 = inlined_call_operand.hbm [shape: f32[2,16,32], index: 9, kind: output, shape index: {}]
  %s10 = sld [smem:[#allocation0]]
  $region81: #{tpu_custom_call.1} parent=0
    _
  %s12 = ssub.s32 1, %s10
  %s13 = scalar_select 0, %s12, %s10
  $region1: #{tpu_custom_call.1} parent=0
    #allocation2 [shape = 'u8[16384]{0}', space=vmem, size = 0x4000, scoped, tag = 'input window, operand 4, single buffered']
    #allocation3 [shape = 's32[2]{0}', space=sflag, size = 0x8, scoped, tag = 'scoped memory for tpu_custom_call.1']
    #allocation4 [shape = 's32[2]{0}', space=sflag, size = 0x8, scoped, tag = 'scoped memory for tpu_custom_call.1']
    #allocation5 [shape = 'u8[16384]{0}', space=vmem, size = 0x4000, scoped, tag = 'input window, operand 5, single buffered']
    #allocation6 [shape = 's32[1]{0}', space=sflag, size = 0x4, scoped, tag = 'scoped memory for tpu_custom_call.1']
    #allocation7 [shape = 'u8[16384]{0}', space=vmem, size = 0x4000, scoped, tag = 'input window, operand 7, single buffered']
    #allocation8 [shape = 'u8[16384]{0}', space=vmem, size = 0x4000, scoped, tag = 'output window, operand 0']
    %14 = vsyncpa [#allocation3], 0
    %15 = vsyncpa [#allocation6], 0
    %16 = vsyncpa [#allocation4], 0
    %s17 = scalar_lea.sflag [#allocation4], 1
    %18 = vsyncpa %s17, 0
    loop: start=0, step=1, limit=4
    $region2: #{tpu_custom_call.1} parent=1 // loop_pre_header
      _
    $region3: #{tpu_custom_call.1} parent=1 // loop_header
      %s20 = sphi 0, %s24
      %p21 = scmp.ge.s32.totalorder %s20, 4
      %s30 = sphi 0, %s32
      %s33 = sphi 0, %s30
      %s34 = sphi 0, %s33
      %s50 = sphi 0, %s34
      %s54 = sphi 0, %s54
      %s56 = sphi 0, %s54
      %s57 = sphi 0, %s56
      %s71 = sphi 0, %s57
      %s75 = sphi 0, %s75
      %s77 = sphi 0, %s75
      %s78 = sphi 0, %s77
      %s92 = sphi 0, %s78
      %s96 = sphi 0, %s96
      %s98 = sphi 0, %s96
      %s99 = sphi 0, %s98
      %s113 = sphi 0, %s99
      %s117 = sphi 0, %s117
      %s119 = sphi 0, %s117
      %s120 = sphi 0, %s119
      %s134 = sphi 0, %s120
      %s138 = sphi 0, %s138
      %s140 = sphi 0, %s138
      %s141 = sphi 0, %s140
      %s155 = sphi 0, %s141
      %s159 = sphi 0, %s159
      %s161 = sphi 0, %s159
      %s162 = sphi 0, %s161
      %s176 = sphi 0, %s162
      %s180 = sphi 0, %s180
      %s182 = sphi 0, %s180
      %s183 = sphi 0, %s182
      %s197 = sphi 0, %s183
      %s201 = sphi 0, %s201
      %s203 = sphi 0, %s201
      %s204 = sphi 0, %s203
      %s218 = sphi 0, %s204
      %s224 = sphi 0, %s226
      %s227 = sphi 0, %s224
      %s228 = sphi 0, %s227
      %s244 = sphi 0, %s228
    $region4: #{tpu_custom_call.1} parent=1 // loop_header_branch
      %23 = sbr.rel (%p21) target = $region8
    $region5: #{tpu_custom_call.1} parent=1 // loop_body
      %s25 = ssub.s32 %s20, 1
      %s26 = ssub.s32 %s20, 2
      %s27 = sadd.s32 %s20, 1
      %s28 = ssub.s32 %s20, %s27
      %p29 = scmp.eq.s32.totalorder %s28, 0
      %s31 = sadd.s32 %s30, 1
      %s32 = scalar_select %p29, %s30, %s31
      %p35 = pneg %p29
      %p36 = scmp.eq.s32.totalorder %s20, 1
      %p37 = por %p35, %p36
      %p38 = scmp.ne.s32.totalorder %s30, %s33
      %p39 = scmp.eq.s32.totalorder %s20, 0
      %p40 = por %p38, %p39
      %p41 = scmp.ne.s32.totalorder %s30, %s33
      %p42 = scmp.eq.s32.totalorder %s25, 1
      %p43 = por %p41, %p42
      %p44 = scmp.ne.s32.totalorder %s33, %s34
      %p45 = scmp.eq.s32.totalorder %s25, 0
      %p46 = por %p44, %p45
      %p47 = scmp.ne.s32.totalorder %s33, %s34
      %p48 = scmp.eq.s32.totalorder %s26, 1
      %p49 = por %p47, %p48
      %p51 = scmp.ne.s32.totalorder %s34, %s50
      %p52 = scmp.eq.s32.totalorder %s26, 0
      %p53 = por %p51, %p52
      %s55 = sadd.s32 %s54, 1
      %p58 = scmp.eq.s32.totalorder %s20, 1
      %p59 = scmp.ne.s32.totalorder %s54, %s56
      %p60 = scmp.eq.s32.totalorder %s20, 0
      %p61 = por %p59, %p60
      %p62 = scmp.ne.s32.totalorder %s54, %s56
      %p63 = scmp.eq.s32.totalorder %s25, 1
      %p64 = por %p62, %p63
      %p65 = scmp.ne.s32.totalorder %s56, %s57
      %p66 = scmp.eq.s32.totalorder %s25, 0
      %p67 = por %p65, %p66
      %p68 = scmp.ne.s32.totalorder %s56, %s57
      %p69 = scmp.eq.s32.totalorder %s26, 1
      %p70 = por %p68, %p69
      %p72 = scmp.ne.s32.totalorder %s57, %s71
      %p73 = scmp.eq.s32.totalorder %s26, 0
      %p74 = por %p72, %p73
      %s76 = sadd.s32 %s75, 1
      %p79 = scmp.eq.s32.totalorder %s20, 1
      %p80 = scmp.ne.s32.totalorder %s75, %s77
      %p81 = scmp.eq.s32.totalorder %s20, 0
      %p82 = por %p80, %p81
      %p83 = scmp.ne.s32.totalorder %s75, %s77
      %p84 = scmp.eq.s32.totalorder %s25, 1
      %p85 = por %p83, %p84
      %p86 = scmp.ne.s32.totalorder %s77, %s78
      %p87 = scmp.eq.s32.totalorder %s25, 0
      %p88 = por %p86, %p87
      %p89 = scmp.ne.s32.totalorder %s77, %s78
      %p90 = scmp.eq.s32.totalorder %s26, 1
      %p91 = por %p89, %p90
      %p93 = scmp.ne.s32.totalorder %s78, %s92
      %p94 = scmp.eq.s32.totalorder %s26, 0
      %p95 = por %p93, %p94
      %s97 = sadd.s32 %s96, 1
      %p100 = scmp.eq.s32.totalorder %s20, 1
      %p101 = scmp.ne.s32.totalorder %s96, %s98
      %p102 = scmp.eq.s32.totalorder %s20, 0
      %p103 = por %p101, %p102
      %p104 = scmp.ne.s32.totalorder %s96, %s98
      %p105 = scmp.eq.s32.totalorder %s25, 1
      %p106 = por %p104, %p105
      %p107 = scmp.ne.s32.totalorder %s98, %s99
      %p108 = scmp.eq.s32.totalorder %s25, 0
      %p109 = por %p107, %p108
      %p110 = scmp.ne.s32.totalorder %s98, %s99
      %p111 = scmp.eq.s32.totalorder %s26, 1
      %p112 = por %p110, %p111
      %p114 = scmp.ne.s32.totalorder %s99, %s113
      %p115 = scmp.eq.s32.totalorder %s26, 0
      %p116 = por %p114, %p115
      %s118 = sadd.s32 %s117, 1
      %p121 = scmp.eq.s32.totalorder %s20, 1
      %p122 = scmp.ne.s32.totalorder %s117, %s119
      %p123 = scmp.eq.s32.totalorder %s20, 0
      %p124 = por %p122, %p123
      %p125 = scmp.ne.s32.totalorder %s117, %s119
      %p126 = scmp.eq.s32.totalorder %s25, 1
      %p127 = por %p125, %p126
      %p128 = scmp.ne.s32.totalorder %s119, %s120
      %p129 = scmp.eq.s32.totalorder %s25, 0
      %p130 = por %p128, %p129
      %p131 = scmp.ne.s32.totalorder %s119, %s120
      %p132 = scmp.eq.s32.totalorder %s26, 1
      %p133 = por %p131, %p132
      %p135 = scmp.ne.s32.totalorder %s120, %s134
      %p136 = scmp.eq.s32.totalorder %s26, 0
      %p137 = por %p135, %p136
      %s139 = sadd.s32 %s138, 1
      %p142 = scmp.eq.s32.totalorder %s20, 1
      %p143 = scmp.ne.s32.totalorder %s138, %s140
      %p144 = scmp.eq.s32.totalorder %s20, 0
      %p145 = por %p143, %p144
      %p146 = scmp.ne.s32.totalorder %s138, %s140
      %p147 = scmp.eq.s32.totalorder %s25, 1
      %p148 = por %p146, %p147
      %p149 = scmp.ne.s32.totalorder %s140, %s141
      %p150 = scmp.eq.s32.totalorder %s25, 0
      %p151 = por %p149, %p150
      %p152 = scmp.ne.s32.totalorder %s140, %s141
      %p153 = scmp.eq.s32.totalorder %s26, 1
      %p154 = por %p152, %p153
      %p156 = scmp.ne.s32.totalorder %s141, %s155
      %p157 = scmp.eq.s32.totalorder %s26, 0
      %p158 = por %p156, %p157
      %s160 = sadd.s32 %s159, 1
      %p163 = scmp.eq.s32.totalorder %s20, 1
      %p164 = scmp.ne.s32.totalorder %s159, %s161
      %p165 = scmp.eq.s32.totalorder %s20, 0
      %p166 = por %p164, %p165
      %p167 = scmp.ne.s32.totalorder %s159, %s161
      %p168 = scmp.eq.s32.totalorder %s25, 1
      %p169 = por %p167, %p168
      %p170 = scmp.ne.s32.totalorder %s161, %s162
      %p171 = scmp.eq.s32.totalorder %s25, 0
      %p172 = por %p170, %p171
      %p173 = scmp.ne.s32.totalorder %s161, %s162
      %p174 = scmp.eq.s32.totalorder %s26, 1
      %p175 = por %p173, %p174
      %p177 = scmp.ne.s32.totalorder %s162, %s176
      %p178 = scmp.eq.s32.totalorder %s26, 0
      %p179 = por %p177, %p178
      %s181 = sadd.s32 %s180, 1
      %p184 = scmp.eq.s32.totalorder %s20, 1
      %p185 = scmp.ne.s32.totalorder %s180, %s182
      %p186 = scmp.eq.s32.totalorder %s20, 0
      %p187 = por %p185, %p186
      %p188 = scmp.ne.s32.totalorder %s180, %s182
      %p189 = scmp.eq.s32.totalorder %s25, 1
      %p190 = por %p188, %p189
      %p191 = scmp.ne.s32.totalorder %s182, %s183
      %p192 = scmp.eq.s32.totalorder %s25, 0
      %p193 = por %p191, %p192
      %p194 = scmp.ne.s32.totalorder %s182, %s183
      %p195 = scmp.eq.s32.totalorder %s26, 1
      %p196 = por %p194, %p195
      %p198 = scmp.ne.s32.totalorder %s183, %s197
      %p199 = scmp.eq.s32.totalorder %s26, 0
      %p200 = por %p198, %p199
      %s202 = sadd.s32 %s201, 1
      %p205 = scmp.eq.s32.totalorder %s20, 1
      %p206 = scmp.ne.s32.totalorder %s201, %s203
      %p207 = scmp.eq.s32.totalorder %s20, 0
      %p208 = por %p206, %p207
      %p209 = scmp.ne.s32.totalorder %s201, %s203
      %p210 = scmp.eq.s32.totalorder %s25, 1
      %p211 = por %p209, %p210
      %p212 = scmp.ne.s32.totalorder %s203, %s204
      %p213 = scmp.eq.s32.totalorder %s25, 0
      %p214 = por %p212, %p213
      %p215 = scmp.ne.s32.totalorder %s203, %s204
      %p216 = scmp.eq.s32.totalorder %s26, 1
      %p217 = por %p215, %p216
      %p219 = scmp.ne.s32.totalorder %s204, %s218
      %p220 = scmp.eq.s32.totalorder %s26, 0
      %p221 = por %p219, %p220
      %s222 = ssub.s32 %s20, %s27
      %p223 = scmp.eq.s32.totalorder %s222, 0
      %s225 = sadd.s32 %s224, 1
      %s226 = scalar_select %p223, %s224, %s225
      %p229 = pneg %p223
      %p230 = scmp.eq.s32.totalorder %s20, 1
      %p231 = por %p229, %p230
      %p232 = scmp.ne.s32.totalorder %s224, %s227
      %p233 = scmp.eq.s32.totalorder %s20, 0
      %p234 = por %p232, %p233
      %p235 = scmp.ne.s32.totalorder %s224, %s227
      %p236 = scmp.eq.s32.totalorder %s25, 1
      %p237 = por %p235, %p236
      %p238 = scmp.ne.s32.totalorder %s227, %s228
      %p239 = scmp.eq.s32.totalorder %s25, 0
      %p240 = por %p238, %p239
      %p241 = scmp.ne.s32.totalorder %s227, %s228
      %p242 = scmp.eq.s32.totalorder %s26, 1
      %p243 = por %p241, %p242
      %p245 = scmp.ne.s32.totalorder %s228, %s244
      %p246 = scmp.eq.s32.totalorder %s26, 0
      %p247 = por %p245, %p246
      %p248 = scmp.le.s32.totalorder 1, %s20
      %p249 = scmp.lt.s32.totalorder %s20, 3
      %p250 = pnand %p248, %p249
      %p251 = pneg %p250
      // Predicated region
      $region9: #{tpu_custom_call.1} parent=5 // pred_check
        _
      $region10: #{tpu_custom_call.1} parent=5 // pred_check_branch
        %253 = sbr.rel (%p250) target = $region12
      $region11: #{tpu_custom_call.1} parent=5 // pred_region
        %s254 = ssub.s32 %s20, 1
        // Predicated region
        $region13: #{tpu_custom_call.1} parent=11 // pred_check
          %p255 = pneg %p67
        $region14: #{tpu_custom_call.1} parent=11 // pred_check_branch
          %257 = sbr.rel (%p255) target = $region16
        $region15: #{tpu_custom_call.1} parent=11 // pred_region
          _
        $region16: #{tpu_custom_call.1} parent=11 // pred_fallthru
          _
        // Predicated region
        $region17: #{tpu_custom_call.1} parent=11 // pred_check
          %p258 = pneg %p88
        $region18: #{tpu_custom_call.1} parent=11 // pred_check_branch
          %260 = sbr.rel (%p258) target = $region20
        $region19: #{tpu_custom_call.1} parent=11 // pred_region
          _
        $region20: #{tpu_custom_call.1} parent=11 // pred_fallthru
          _
        // Predicated region
        $region21: #{tpu_custom_call.1} parent=11 // pred_check
          %p261 = pneg %p109
        $region22: #{tpu_custom_call.1} parent=11 // pred_check_branch
          %263 = sbr.rel (%p261) target = $region24
        $region23: #{tpu_custom_call.1} parent=11 // pred_region
          _
        $region24: #{tpu_custom_call.1} parent=11 // pred_fallthru
          _
        // Predicated region
        $region25: #{tpu_custom_call.1} parent=11 // pred_check
          %p264 = pneg %p130
        $region26: #{tpu_custom_call.1} parent=11 // pred_check_branch
          %266 = sbr.rel (%p264) target = $region28
        $region27: #{tpu_custom_call.1} parent=11 // pred_region
          %268 = vsyncadd [#allocation3], 0
          %s269 = sshll.u32 %s4, 4
          %s270 = int_to_ptr.hbm [resolvable:$true] %s269
          %s271 = sshll.u32 [#allocation2], 4
          %s272 = int_to_ptr.vmem [resolvable:$true] %s271
          %277 = dma.hbm_to_vmem [thread:$0]  %s270, 512, %s272, [#allocation3], 128, 128, 8
        $region28: #{tpu_custom_call.1} parent=11 // pred_fallthru
          _
        // Predicated region
        $region29: #{tpu_custom_call.1} parent=11 // pred_check
          %p278 = pneg %p151
        $region30: #{tpu_custom_call.1} parent=11 // pred_check_branch
          %280 = sbr.rel (%p278) target = $region32
        $region31: #{tpu_custom_call.1} parent=11 // pred_region
          %282 = vsyncadd [#allocation6], 0
          %s283 = sshll.u32 %s5, 4
          %s284 = int_to_ptr.hbm [resolvable:$true] %s283
          %s285 = sshll.u32 [#allocation5], 4
          %s286 = int_to_ptr.vmem [resolvable:$true] %s285
          %291 = dma.hbm_to_vmem [thread:$0]  %s284, 512, %s286, [#allocation6], 128, 128, 8
        $region32: #{tpu_custom_call.1} parent=11 // pred_fallthru
          _
        // Predicated region
        $region33: #{tpu_custom_call.1} parent=11 // pred_check
          %p292 = pneg %p172
        $region34: #{tpu_custom_call.1} parent=11 // pred_check_branch
          %294 = sbr.rel (%p292) target = $region36
        $region35: #{tpu_custom_call.1} parent=11 // pred_region
          _
        $region36: #{tpu_custom_call.1} parent=11 // pred_fallthru
          _
        // Predicated region
        $region37: #{tpu_custom_call.1} parent=11 // pred_check
          %p295 = pneg %p193
        $region38: #{tpu_custom_call.1} parent=11 // pred_check_branch
          %297 = sbr.rel (%p295) target = $region40
        $region39: #{tpu_custom_call.1} parent=11 // pred_region
          %299 = vsyncadd [#allocation6], 0
          %s300 = sshll.u32 %s7, 4
          %s301 = int_to_ptr.hbm [resolvable:$true] %s300
          %s302 = sshll.u32 [#allocation7], 4
          %s303 = int_to_ptr.vmem [resolvable:$true] %s302
          %308 = dma.hbm_to_vmem [thread:$0]  %s301, 512, %s303, [#allocation6], 128, 128, 8
        $region40: #{tpu_custom_call.1} parent=11 // pred_fallthru
          _
        // Predicated region
        $region41: #{tpu_custom_call.1} parent=11 // pred_check
          %p309 = pneg %p214
        $region42: #{tpu_custom_call.1} parent=11 // pred_check_branch
          %311 = sbr.rel (%p309) target = $region44
        $region43: #{tpu_custom_call.1} parent=11 // pred_region
          _
        $region44: #{tpu_custom_call.1} parent=11 // pred_fallthru
          _
      $region12: #{tpu_custom_call.1} parent=5 // pred_fallthru
        _
      %p312 = scmp.lt.s32.totalorder %s20, 2
      // Predicated region
      $region45: #{tpu_custom_call.1} parent=5 // pred_check
        %p313 = pneg %p312
      $region46: #{tpu_custom_call.1} parent=5 // pred_check_branch
        %315 = sbr.rel (%p313) target = $region48
      $region47: #{tpu_custom_call.1} parent=5 // pred_region
        // Predicated region
        $region49: #{tpu_custom_call.1} parent=47 // pred_check
          %p316 = pneg %p40
        $region50: #{tpu_custom_call.1} parent=47 // pred_check_branch
          %318 = sbr.rel (%p316) target = $region52
        $region51: #{tpu_custom_call.1} parent=47 // pred_region
          %p319 = scmp.lt.s32.totalorder %s20, 1
          %s320 = scalar_select %p319, %s20, 1
          %s321 = smul.addr %s320, 2
          %s322 = smul.addr %s321, 8
          %s323 = scalar_lea.vmem %s0, %s322
        $region52: #{tpu_custom_call.1} parent=47 // pred_fallthru
          _
      $region48: #{tpu_custom_call.1} parent=5 // pred_fallthru
        _
      %p324 = scmp.le.s32.totalorder 1, %s20
      %p325 = scmp.lt.s32.totalorder %s20, 3
      %p326 = pnand %p324, %p325
      %p327 = pneg %p326
      // Predicated region
      $region53: #{tpu_custom_call.1} parent=5 // pred_check
        _
      $region54: #{tpu_custom_call.1} parent=5 // pred_check_branch
        %329 = sbr.rel (%p326) target = $region56
      $region55: #{tpu_custom_call.1} parent=5 // pred_region
        %s330 = ssub.s32 %s20, 1
        // Predicated region
        $region57: #{tpu_custom_call.1} parent=55 // pred_check
          %p331 = pneg %p130
        $region58: #{tpu_custom_call.1} parent=55 // pred_check_branch
          %333 = sbr.rel (%p331) target = $region60
        $region59: #{tpu_custom_call.1} parent=55 // pred_region
          %335 = dma.done [#allocation3], 512
        $region60: #{tpu_custom_call.1} parent=55 // pred_fallthru
          _
        // Predicated region
        $region61: #{tpu_custom_call.1} parent=55 // pred_check
          %p336 = pneg %p151
        $region62: #{tpu_custom_call.1} parent=55 // pred_check_branch
          %338 = sbr.rel (%p336) target = $region64
        $region63: #{tpu_custom_call.1} parent=55 // pred_region
          %340 = dma.done [#allocation6], 512
        $region64: #{tpu_custom_call.1} parent=55 // pred_fallthru
          _
        // Predicated region
        $region65: #{tpu_custom_call.1} parent=55 // pred_check
          %p341 = pneg %p193
        $region66: #{tpu_custom_call.1} parent=55 // pred_check_branch
          %343 = sbr.rel (%p341) target = $region68
        $region67: #{tpu_custom_call.1} parent=55 // pred_region
          %345 = dma.done [#allocation6], 512
        $region68: #{tpu_custom_call.1} parent=55 // pred_fallthru
          _
        %p346 = scmp.lt.s32.totalorder %s25, 1
        %s347 = scalar_select %p346, %s25, 1
        %s348 = smul.addr %s347, 2
        %s349 = smul.addr %s348, 8
        %s350 = scalar_lea.vmem %s0, %s349
        %p351 = pneg %p46
        %p352 = pneg %p43
        %p353 = pneg %p67
        %p354 = pneg %p64
        %p355 = pneg %p88
        %p356 = pneg %p85
        %p357 = pneg %p109
        %p358 = pneg %p106
        %p359 = pneg %p130
        %p360 = pneg %p127
        %p361 = pneg %p151
        %p362 = pneg %p148
        %p363 = pneg %p172
        %p364 = pneg %p169
        %p365 = pneg %p193
        %p366 = pneg %p190
        %p367 = pneg %p214
        %p368 = pneg %p211
        %p369 = pneg %p240
        %p370 = pneg %p237
        %s371 = sand.u32 %s227, 1
        %s372 = scalar_lea.sflag [#allocation4], %s371
        %s373 = sand.u32 %s227, 1
        %s374 = smul.addr %s373, 16
        %s375 = scalar_lea.vmem [#allocation8], %s374
        %p376 = scmp.lt.s32.totalorder %s25, 1
        %s377 = scalar_select %p376, %s25, 1
        %s378 = smul.addr %s377, 2
        %s379 = smul.addr %s378, 8
        %s380 = scalar_lea.vmem %s0, %s379
        %v381 = vld [vmem:[%s380] sm:$0xff]
        %v382 = vld [vmem:[%s380 + $0x8] sm:$0xff]
        %v383 = vld [vmem:[%s2] sm:$0xff]
        %v384 = vld [vmem:[%s3] sm:$0x1]
        %v386 = vperm.slane %v384, 0
        %vm388 = vcmask 64512
        %v390 = vsel %vm388, %v381, 0
        %v393 = vsel %vm388, %v382, 0
        %395 = vmatpush.msra.mxu0 0.0
        %396 = vmatpush.msra.mxu0 0.0
        %397 = vmatpush.msra.mxu0 0.0
        %398 = vmatpush.msra.mxu0 0.0
        %399 = vmatpush.msra.mxu0 0.0
        %400 = vmatpush.msra.mxu0 0.0
        %401 = vmatpush.msra.mxu0 0.0
        %402 = vmatpush.msra.mxu0 0.0
        %403 = vmatpush.msra.mxu0 0.0
        %404 = vmatpush.msra.mxu0 0.0
        %405 = vmatpush.msra.mxu0 0.0
        %406 = vmatpush.msra.mxu0 0.0
        %407 = vmatpush.msra.mxu0 0.0
        %408 = vmatpush.msra.mxu0 0.0
        %409 = vmatpush.msra.mxu0 0.0
        %410 = vmatpush.msra.mxu0 %v383
        %411 = vmatmul.f32.gmra.mxu0 %v390
        %v412 = vpop.f32.mrf.mxu0
        %v413 = vadd.f32 %v386, %v412
        %414 = vmatmul.f32.gmra.mxu0 %v393
        %v415 = vpop.f32.mrf.mxu0
        %v416 = vadd.f32 %v386, %v415
        %417 = vdwg.mxu0
        %v418 = vld [vmem:[%s1] sm:$0xff]
        %v419 = vld [vmem:[%s1 + $0x8] sm:$0xff]
        %v420 = vld [vmem:[%s1 + $0x10] sm:$0xff]
        %v421 = vld [vmem:[%s1 + $0x18] sm:$0xff]
        %424 = vrot.lane.b32.xlu0 %v413, 120
        %v425 = vpop.permute.xlu0 %424
        %426 = vrot.lane.b32.xlu0 %v416, 120
        %v427 = vpop.permute.xlu0 %426
        %428 = vrot.lane.b32.xlu0 %v413, 112
        %v429 = vpop.permute.xlu0 %428
        %430 = vrot.lane.b32.xlu0 %v416, 112
        %v431 = vpop.permute.xlu0 %430
        %432 = vrot.lane.b32.xlu0 %v413, 104
        %v433 = vpop.permute.xlu0 %432
        %434 = vrot.lane.b32.xlu0 %v416, 104
        %v435 = vpop.permute.xlu0 %434
        %v437 = vsel %vm388, %v418, 0
        %v439 = vsel %vm388, %v413, 0
        %v441 = vsel %vm388, %v416, 0
        %443 = vmatpush.xpose.msra.mxu0 0.0
        %444 = vmatpush.xpose.msra.mxu0 0.0
        %445 = vmatpush.xpose.msra.mxu0 0.0
        %446 = vmatpush.xpose.msra.mxu0 0.0
        %447 = vmatpush.xpose.msra.mxu0 0.0
        %448 = vmatpush.xpose.msra.mxu0 0.0
        %449 = vmatpush.xpose.msra.mxu0 0.0
        %450 = vmatpush.xpose.msra.mxu0 0.0
        %451 = vmatpush.xpose.msra.mxu0 0.0
        %452 = vmatpush.xpose.msra.mxu0 0.0
        %453 = vmatpush.xpose.msra.mxu0 0.0
        %454 = vmatpush.xpose.msra.mxu0 0.0
        %455 = vmatpush.xpose.msra.mxu0 0.0
        %456 = vmatpush.xpose.msra.mxu0 0.0
        %457 = vmatpush.xpose.msra.mxu0 %v441
        %458 = vmatpush.xpose.msra.mxu0 %v439
        %459 = vmatmul.f32.gmra.mxu0 %v437
        %v460 = vpop.f32.mrf.mxu0
        %v461 = vadd.f32 0.0, %v460
        %462 = vdwg.mxu0
        %v464 = vsel %vm388, %v419, 0
        %v466 = vsel %vm388, %v425, 0
        %v468 = vsel %vm388, %v427, 0
        %470 = vmatpush.xpose.msra.mxu0 0.0
        %471 = vmatpush.xpose.msra.mxu0 0.0
        %472 = vmatpush.xpose.msra.mxu0 0.0
        %473 = vmatpush.xpose.msra.mxu0 0.0
        %474 = vmatpush.xpose.msra.mxu0 0.0
        %475 = vmatpush.xpose.msra.mxu0 0.0
        %476 = vmatpush.xpose.msra.mxu0 0.0
        %477 = vmatpush.xpose.msra.mxu0 0.0
        %478 = vmatpush.xpose.msra.mxu0 0.0
        %479 = vmatpush.xpose.msra.mxu0 0.0
        %480 = vmatpush.xpose.msra.mxu0 0.0
        %481 = vmatpush.xpose.msra.mxu0 0.0
        %482 = vmatpush.xpose.msra.mxu0 0.0
        %483 = vmatpush.xpose.msra.mxu0 0.0
        %484 = vmatpush.xpose.msra.mxu0 %v468
        %485 = vmatpush.xpose.msra.mxu0 %v466
        %486 = vmatmul.f32.gmra.mxu0 %v464
        %v487 = vpop.f32.mrf.mxu0
        %v488 = vadd.f32 0.0, %v487
        %489 = vdwg.mxu0
        %v491 = vsel %vm388, %v420, 0
        %v493 = vsel %vm388, %v429, 0
        %v495 = vsel %vm388, %v431, 0
        %497 = vmatpush.xpose.msra.mxu0 0.0
        %498 = vmatpush.xpose.msra.mxu0 0.0
        %499 = vmatpush.xpose.msra.mxu0 0.0
        %500 = vmatpush.xpose.msra.mxu0 0.0
        %501 = vmatpush.xpose.msra.mxu0 0.0
        %502 = vmatpush.xpose.msra.mxu0 0.0
        %503 = vmatpush.xpose.msra.mxu0 0.0
        %504 = vmatpush.xpose.msra.mxu0 0.0
        %505 = vmatpush.xpose.msra.mxu0 0.0
        %506 = vmatpush.xpose.msra.mxu0 0.0
        %507 = vmatpush.xpose.msra.mxu0 0.0
        %508 = vmatpush.xpose.msra.mxu0 0.0
        %509 = vmatpush.xpose.msra.mxu0 0.0
        %510 = vmatpush.xpose.msra.mxu0 0.0
        %511 = vmatpush.xpose.msra.mxu0 %v495
        %512 = vmatpush.xpose.msra.mxu0 %v493
        %513 = vmatmul.f32.gmra.mxu0 %v491
        %v514 = vpop.f32.mrf.mxu0
        %v515 = vadd.f32 0.0, %v514
        %516 = vdwg.mxu0
        %v518 = vsel %vm388, %v421, 0
        %v520 = vsel %vm388, %v433, 0
        %v522 = vsel %vm388, %v435, 0
        %524 = vmatpush.xpose.msra.mxu0 0.0
        %525 = vmatpush.xpose.msra.mxu0 0.0
        %526 = vmatpush.xpose.msra.mxu0 0.0
        %527 = vmatpush.xpose.msra.mxu0 0.0
        %528 = vmatpush.xpose.msra.mxu0 0.0
        %529 = vmatpush.xpose.msra.mxu0 0.0
        %530 = vmatpush.xpose.msra.mxu0 0.0
        %531 = vmatpush.xpose.msra.mxu0 0.0
        %532 = vmatpush.xpose.msra.mxu0 0.0
        %533 = vmatpush.xpose.msra.mxu0 0.0
        %534 = vmatpush.xpose.msra.mxu0 0.0
        %535 = vmatpush.xpose.msra.mxu0 0.0
        %536 = vmatpush.xpose.msra.mxu0 0.0
        %537 = vmatpush.xpose.msra.mxu0 0.0
        %538 = vmatpush.xpose.msra.mxu0 %v522
        %539 = vmatpush.xpose.msra.mxu0 %v520
        %540 = vmatmul.f32.gmra.mxu0 %v518
        %v541 = vpop.f32.mrf.mxu0
        %v542 = vadd.f32 0.0, %v541
        %543 = vdwg.mxu0
        %v544 = vmul.f32 %v461, 0.17677669
        %v545 = vmul.f32 %v488, 0.17677669
        %v546 = vmul.f32 %v515, 0.17677669
        %v547 = vmul.f32 %v542, 0.17677669
        %vm548 = vcmask 130048
        %v549 = vsel %vm548, %v544, -inf
        %550 = vmax.xlane.f32.xlu0 %v549
        %v551 = vpop.xlane.xlu0 %550
        %v552 = vsel %vm548, %v545, -inf
        %553 = vmax.xlane.f32.xlu0 %v552
        %v554 = vpop.xlane.xlu0 %553
        %v555 = vsel %vm548, %v546, -inf
        %556 = vmax.xlane.f32.xlu0 %v555
        %v557 = vpop.xlane.xlu0 %556
        %v558 = vsel %vm548, %v547, -inf
        %559 = vmax.xlane.f32.xlu0 %v558
        %v560 = vpop.xlane.xlu0 %559
        %v561 = vsub.f32 %v544, %v551
        %v562 = vsub.f32 %v545, %v554
        %v563 = vsub.f32 %v546, %v557
        %v564 = vsub.f32 %v547, %v560
        %v565 = vmul.f32 %v561, 1.442695
        %v566 = vpow.pop %v565
        %v567 = vmul.f32 %v562, 1.442695
        %v568 = vpow.pop %v567
        %v569 = vmul.f32 %v563, 1.442695
        %v570 = vpow.pop %v569
        %v571 = vmul.f32 %v564, 1.442695
        %v572 = vpow.pop %v571
        %v573 = vsel %vm548, %v566, 0.0
        %574 = vadd.xlane.f32.xlu0 %v573
        %v575 = vpop.xlane.xlu0 %574
        %v576 = vsel %vm548, %v568, 0.0
        %577 = vadd.xlane.f32.xlu0 %v576
        %v578 = vpop.xlane.xlu0 %577
        %v579 = vsel %vm548, %v570, 0.0
        %580 = vadd.xlane.f32.xlu0 %v579
        %v581 = vpop.xlane.xlu0 %580
        %v582 = vsel %vm548, %v572, 0.0
        %583 = vadd.xlane.f32.xlu0 %v582
        %v584 = vpop.xlane.xlu0 %583
        %v585 = vrcp.pop %v575
        %v586 = vmul.f32 %v575, %v585
        %v587 = vsub.f32 1.0, %v586
        %v588 = vmul.f32 %v585, %v587
        %v589 = vadd.f32 %v585, %v588
        %vm590 = vweird.f32 %v575
        %vm591 = vweird.f32 %v585
        %vm592 = vmor %vm590, %vm591
        %v593 = vsel %vm592, %v585, %v589
        %v594 = vand.u32 2147483647, %v575
        %vm595 = vcmp.eq.f32.partialorder %v594, 8.507059e+37
        %v596 = vand.u32 %v575, 2147483648
        %v597 = vor.u32 1.1754944e-38, %v596
        %v598 = vsel %vm595, %v597, %v593
        %v599 = vmul.f32 %v566, %v598
        %v600 = vrcp.pop %v578
        %v601 = vmul.f32 %v578, %v600
        %v602 = vsub.f32 1.0, %v601
        %v603 = vmul.f32 %v600, %v602
        %v604 = vadd.f32 %v600, %v603
        %vm605 = vweird.f32 %v578
        %vm606 = vweird.f32 %v600
        %vm607 = vmor %vm605, %vm606
        %v608 = vsel %vm607, %v600, %v604
        %v609 = vand.u32 2147483647, %v578
        %vm610 = vcmp.eq.f32.partialorder %v609, 8.507059e+37
        %v611 = vand.u32 %v578, 2147483648
        %v612 = vor.u32 1.1754944e-38, %v611
        %v613 = vsel %vm610, %v612, %v608
        %v614 = vmul.f32 %v568, %v613
        %v615 = vrcp.pop %v581
        %v616 = vmul.f32 %v581, %v615
        %v617 = vsub.f32 1.0, %v616
        %v618 = vmul.f32 %v615, %v617
        %v619 = vadd.f32 %v615, %v618
        %vm620 = vweird.f32 %v581
        %vm621 = vweird.f32 %v615
        %vm622 = vmor %vm620, %vm621
        %v623 = vsel %vm622, %v615, %v619
        %v624 = vand.u32 2147483647, %v581
        %vm625 = vcmp.eq.f32.partialorder %v624, 8.507059e+37
        %v626 = vand.u32 %v581, 2147483648
        %v627 = vor.u32 1.1754944e-38, %v626
        %v628 = vsel %vm625, %v627, %v623
        %v629 = vmul.f32 %v570, %v628
        %v630 = vrcp.pop %v584
        %v631 = vmul.f32 %v584, %v630
        %v632 = vsub.f32 1.0, %v631
        %v633 = vmul.f32 %v630, %v632
        %v634 = vadd.f32 %v630, %v633
        %vm635 = vweird.f32 %v584
        %vm636 = vweird.f32 %v630
        %vm637 = vmor %vm635, %vm636
        %v638 = vsel %vm637, %v630, %v634
        %v639 = vand.u32 2147483647, %v584
        %vm640 = vcmp.eq.f32.partialorder %v639, 8.507059e+37
        %v641 = vand.u32 %v584, 2147483648
        %v642 = vor.u32 1.1754944e-38, %v641
        %v643 = vsel %vm640, %v642, %v638
        %v644 = vmul.f32 %v572, %v643
        %645 = vrot.lane.b32.xlu0 %v413, 96
        %v646 = vpop.permute.xlu0 %645
        %647 = vrot.lane.b32.xlu0 %v416, 96
        %v648 = vpop.permute.xlu0 %647
        %v652 = vsel %vm548, %v599, 0
        %654 = vmatpush.msra.mxu0 0.0
        %655 = vmatpush.msra.mxu0 0.0
        %656 = vmatpush.msra.mxu0 0.0
        %657 = vmatpush.msra.mxu0 0.0
        %658 = vmatpush.msra.mxu0 0.0
        %659 = vmatpush.msra.mxu0 0.0
        %660 = vmatpush.msra.mxu0 0.0
        %661 = vmatpush.msra.mxu0 0.0
        %662 = vmatpush.msra.mxu0 0.0
        %663 = vmatpush.msra.mxu0 0.0
        %664 = vmatpush.msra.mxu0 0.0
        %665 = vmatpush.msra.mxu0 0.0
        %666 = vmatpush.msra.mxu0 0.0
        %667 = vmatpush.msra.mxu0 0.0
        %668 = vmatpush.msra.mxu0 %v648
        %669 = vmatpush.msra.mxu0 %v646
        %670 = vmatmul.f32.gmra.mxu0 %v652
        %v671 = vpop.f32.mrf.mxu0
        %v672 = vadd.f32 0.0, %v671
        %673 = vdwg.mxu0
        %674 = vrot.lane.b32.xlu0 %v425, 96
        %v675 = vpop.permute.xlu0 %674
        %676 = vrot.lane.b32.xlu0 %v427, 96
        %v677 = vpop.permute.xlu0 %676
        %v681 = vsel %vm548, %v614, 0
        %683 = vmatpush.msra.mxu0 0.0
        %684 = vmatpush.msra.mxu0 0.0
        %685 = vmatpush.msra.mxu0 0.0
        %686 = vmatpush.msra.mxu0 0.0
        %687 = vmatpush.msra.mxu0 0.0
        %688 = vmatpush.msra.mxu0 0.0
        %689 = vmatpush.msra.mxu0 0.0
        %690 = vmatpush.msra.mxu0 0.0
        %691 = vmatpush.msra.mxu0 0.0
        %692 = vmatpush.msra.mxu0 0.0
        %693 = vmatpush.msra.mxu0 0.0
        %694 = vmatpush.msra.mxu0 0.0
        %695 = vmatpush.msra.mxu0 0.0
        %696 = vmatpush.msra.mxu0 0.0
        %697 = vmatpush.msra.mxu0 %v677
        %698 = vmatpush.msra.mxu0 %v675
        %699 = vmatmul.f32.gmra.mxu0 %v681
        %v700 = vpop.f32.mrf.mxu0
        %v701 = vadd.f32 0.0, %v700
        %702 = vdwg.mxu0
        %703 = vrot.lane.b32.xlu0 %v429, 96
        %v704 = vpop.permute.xlu0 %703
        %705 = vrot.lane.b32.xlu0 %v431, 96
        %v706 = vpop.permute.xlu0 %705
        %v710 = vsel %vm548, %v629, 0
        %712 = vmatpush.msra.mxu0 0.0
        %713 = vmatpush.msra.mxu0 0.0
        %714 = vmatpush.msra.mxu0 0.0
        %715 = vmatpush.msra.mxu0 0.0
        %716 = vmatpush.msra.mxu0 0.0
        %717 = vmatpush.msra.mxu0 0.0
        %718 = vmatpush.msra.mxu0 0.0
        %719 = vmatpush.msra.mxu0 0.0
        %720 = vmatpush.msra.mxu0 0.0
        %721 = vmatpush.msra.mxu0 0.0
        %722 = vmatpush.msra.mxu0 0.0
        %723 = vmatpush.msra.mxu0 0.0
        %724 = vmatpush.msra.mxu0 0.0
        %725 = vmatpush.msra.mxu0 0.0
        %726 = vmatpush.msra.mxu0 %v706
        %727 = vmatpush.msra.mxu0 %v704
        %728 = vmatmul.f32.gmra.mxu0 %v710
        %v729 = vpop.f32.mrf.mxu0
        %v730 = vadd.f32 0.0, %v729
        %731 = vdwg.mxu0
        %732 = vrot.lane.b32.xlu0 %v433, 96
        %v733 = vpop.permute.xlu0 %732
        %734 = vrot.lane.b32.xlu0 %v435, 96
        %v735 = vpop.permute.xlu0 %734
        %v739 = vsel %vm548, %v644, 0
        %741 = vmatpush.msra.mxu0 0.0
        %742 = vmatpush.msra.mxu0 0.0
        %743 = vmatpush.msra.mxu0 0.0
        %744 = vmatpush.msra.mxu0 0.0
        %745 = vmatpush.msra.mxu0 0.0
        %746 = vmatpush.msra.mxu0 0.0
        %747 = vmatpush.msra.mxu0 0.0
        %748 = vmatpush.msra.mxu0 0.0
        %749 = vmatpush.msra.mxu0 0.0
        %750 = vmatpush.msra.mxu0 0.0
        %751 = vmatpush.msra.mxu0 0.0
        %752 = vmatpush.msra.mxu0 0.0
        %753 = vmatpush.msra.mxu0 0.0
        %754 = vmatpush.msra.mxu0 0.0
        %755 = vmatpush.msra.mxu0 %v735
        %756 = vmatpush.msra.mxu0 %v733
        %757 = vmatmul.f32.gmra.mxu0 %v739
        %v758 = vpop.f32.mrf.mxu0
        %v759 = vadd.f32 0.0, %v758
        %760 = vdwg.mxu0
        %v761 = vadd.f32 %v418, %v672
        %v762 = vadd.f32 %v419, %v701
        %v763 = vadd.f32 %v420, %v730
        %v764 = vadd.f32 %v421, %v759
        %766 = vrot.lane.b32.xlu0 %v762, 8
        %v767 = vpop.permute.xlu0 %766
        %770 = vrot.lane.b32.xlu0 %v763, 16
        %v771 = vpop.permute.xlu0 %770
        %774 = vrot.lane.b32.xlu0 %v764, 24
        %v775 = vpop.permute.xlu0 %774
        %v777 = vsel %vm388, %v761, %v767
        %v778 = vsel %vm548, %v777, %v771
        %vm779 = vcmask 195584
        %v780 = vsel %vm779, %v778, %v775
        %v781 = vld [vmem:[%s8] sm:$0x1]
        %v782 = vld [vmem:[#allocation2] sm:$0xff]
        %v783 = vld [vmem:[#allocation2 + $0x8] sm:$0xff]
        %v784 = vld [vmem:[#allocation2 + $0x10] sm:$0xff]
        %v785 = vld [vmem:[#allocation2 + $0x18] sm:$0xff]
        %v786 = vperm.slane %v781, 0
        %vm787 = vcmask 261120
        %v789 = vsel %vm787, %v780, 0
        %791 = vmatpush.msra.mxu0 0.0
        %792 = vmatpush.msra.mxu0 0.0
        %793 = vmatpush.msra.mxu0 0.0
        %794 = vmatpush.msra.mxu0 0.0
        %795 = vmatpush.msra.mxu0 0.0
        %796 = vmatpush.msra.mxu0 0.0
        %797 = vmatpush.msra.mxu0 0.0
        %798 = vmatpush.msra.mxu0 0.0
        %799 = vmatpush.msra.mxu0 0.0
        %800 = vmatpush.msra.mxu0 0.0
        %801 = vmatpush.msra.mxu0 0.0
        %802 = vmatpush.msra.mxu0 0.0
        %803 = vmatpush.msra.mxu0 %v785
        %804 = vmatpush.msra.mxu0 %v784
        %805 = vmatpush.msra.mxu0 %v783
        %806 = vmatpush.msra.mxu0 %v782
        %807 = vmatmul.f32.gmra.mxu0 %v789
        %v808 = vpop.f32.mrf.mxu0
        %v809 = vadd.f32 %v786, %v808
        %810 = vdwg.mxu0
        %v811 = vmax.f32 %v809, 0.0
        %v812 = vadd.f32 %v780, %v811
        %v813 = vld [vmem:[#allocation5] sm:$0xff]
        %v814 = vld [vmem:[#allocation5 + $0x8] sm:$0xff]
        %v815 = vld [vmem:[#allocation5 + $0x10] sm:$0xff]
        %v816 = vld [vmem:[#allocation5 + $0x18] sm:$0xff]
        %v817 = vld [vmem:[%s6] sm:$0x1]
        %v819 = vperm.slane %v817, 0
        %v822 = vsel %vm787, %v812, 0
        %824 = vmatpush.msra.mxu0 0.0
        %825 = vmatpush.msra.mxu0 0.0
        %826 = vmatpush.msra.mxu0 0.0
        %827 = vmatpush.msra.mxu0 0.0
        %828 = vmatpush.msra.mxu0 0.0
        %829 = vmatpush.msra.mxu0 0.0
        %830 = vmatpush.msra.mxu0 0.0
        %831 = vmatpush.msra.mxu0 0.0
        %832 = vmatpush.msra.mxu0 0.0
        %833 = vmatpush.msra.mxu0 0.0
        %834 = vmatpush.msra.mxu0 0.0
        %835 = vmatpush.msra.mxu0 0.0
        %836 = vmatpush.msra.mxu0 %v816
        %837 = vmatpush.msra.mxu0 %v815
        %838 = vmatpush.msra.mxu0 %v814
        %839 = vmatpush.msra.mxu0 %v813
        %840 = vmatmul.f32.gmra.mxu0 %v822
        %v841 = vpop.f32.mrf.mxu0
        %v842 = vadd.f32 %v819, %v841
        %843 = vdwg.mxu0
        %851 = vrot.lane.b32.xlu0 %v842, 120
        %v852 = vpop.permute.xlu0 %851
        %853 = vrot.lane.b32.xlu0 %v842, 112
        %v854 = vpop.permute.xlu0 %853
        %855 = vrot.lane.b32.xlu0 %v842, 104
        %v856 = vpop.permute.xlu0 %855
        %857 = vrot.lane.b32.xlu0 %v413, 64
        %v858 = vpop.permute.xlu0 %857
        %859 = vrot.lane.b32.xlu0 %v416, 64
        %v860 = vpop.permute.xlu0 %859
        %v861 = vsel %vm388, %v858, 0
        %v863 = vsel %vm388, %v860, 0
        %v865 = vsel %vm388, %v842, 0
        %867 = vmatpush.xpose.msra.mxu0 0.0
        %868 = vmatpush.xpose.msra.mxu0 0.0
        %869 = vmatpush.xpose.msra.mxu0 0.0
        %870 = vmatpush.xpose.msra.mxu0 0.0
        %871 = vmatpush.xpose.msra.mxu0 0.0
        %872 = vmatpush.xpose.msra.mxu0 0.0
        %873 = vmatpush.xpose.msra.mxu0 0.0
        %874 = vmatpush.xpose.msra.mxu0 0.0
        %875 = vmatpush.xpose.msra.mxu0 0.0
        %876 = vmatpush.xpose.msra.mxu0 0.0
        %877 = vmatpush.xpose.msra.mxu0 0.0
        %878 = vmatpush.xpose.msra.mxu0 0.0
        %879 = vmatpush.xpose.msra.mxu0 0.0
        %880 = vmatpush.xpose.msra.mxu0 0.0
        %881 = vmatpush.xpose.msra.mxu0 0.0
        %882 = vmatpush.xpose.msra.mxu0 %v865
        %883 = vmatmul.f32.gmra.mxu0 %v861
        %v884 = vpop.f32.mrf.mxu0
        %v885 = vadd.f32 0.0, %v884
        %886 = vmatmul.f32.gmra.mxu0 %v863
        %v887 = vpop.f32.mrf.mxu0
        %v888 = vadd.f32 0.0, %v887
        %889 = vdwg.mxu0
        %890 = vrot.lane.b32.xlu0 %v425, 64
        %v891 = vpop.permute.xlu0 %890
        %892 = vrot.lane.b32.xlu0 %v427, 64
        %v893 = vpop.permute.xlu0 %892
        %v894 = vsel %vm388, %v891, 0
        %v896 = vsel %vm388, %v893, 0
        %v898 = vsel %vm388, %v852, 0
        %900 = vmatpush.xpose.msra.mxu0 0.0
        %901 = vmatpush.xpose.msra.mxu0 0.0
        %902 = vmatpush.xpose.msra.mxu0 0.0
        %903 = vmatpush.xpose.msra.mxu0 0.0
        %904 = vmatpush.xpose.msra.mxu0 0.0
        %905 = vmatpush.xpose.msra.mxu0 0.0
        %906 = vmatpush.xpose.msra.mxu0 0.0
        %907 = vmatpush.xpose.msra.mxu0 0.0
        %908 = vmatpush.xpose.msra.mxu0 0.0
        %909 = vmatpush.xpose.msra.mxu0 0.0
        %910 = vmatpush.xpose.msra.mxu0 0.0
        %911 = vmatpush.xpose.msra.mxu0 0.0
        %912 = vmatpush.xpose.msra.mxu0 0.0
        %913 = vmatpush.xpose.msra.mxu0 0.0
        %914 = vmatpush.xpose.msra.mxu0 0.0
        %915 = vmatpush.xpose.msra.mxu0 %v898
        %916 = vmatmul.f32.gmra.mxu0 %v894
        %v917 = vpop.f32.mrf.mxu0
        %v918 = vadd.f32 0.0, %v917
        %919 = vmatmul.f32.gmra.mxu0 %v896
        %v920 = vpop.f32.mrf.mxu0
        %v921 = vadd.f32 0.0, %v920
        %922 = vdwg.mxu0
        %923 = vrot.lane.b32.xlu0 %v429, 64
        %v924 = vpop.permute.xlu0 %923
        %925 = vrot.lane.b32.xlu0 %v431, 64
        %v926 = vpop.permute.xlu0 %925
        %v927 = vsel %vm388, %v924, 0
        %v929 = vsel %vm388, %v926, 0
        %v931 = vsel %vm388, %v854, 0
        %933 = vmatpush.xpose.msra.mxu0 0.0
        %934 = vmatpush.xpose.msra.mxu0 0.0
        %935 = vmatpush.xpose.msra.mxu0 0.0
        %936 = vmatpush.xpose.msra.mxu0 0.0
        %937 = vmatpush.xpose.msra.mxu0 0.0
        %938 = vmatpush.xpose.msra.mxu0 0.0
        %939 = vmatpush.xpose.msra.mxu0 0.0
        %940 = vmatpush.xpose.msra.mxu0 0.0
        %941 = vmatpush.xpose.msra.mxu0 0.0
        %942 = vmatpush.xpose.msra.mxu0 0.0
        %943 = vmatpush.xpose.msra.mxu0 0.0
        %944 = vmatpush.xpose.msra.mxu0 0.0
        %945 = vmatpush.xpose.msra.mxu0 0.0
        %946 = vmatpush.xpose.msra.mxu0 0.0
        %947 = vmatpush.xpose.msra.mxu0 0.0
        %948 = vmatpush.xpose.msra.mxu0 %v931
        %949 = vmatmul.f32.gmra.mxu0 %v927
        %v950 = vpop.f32.mrf.mxu0
        %v951 = vadd.f32 0.0, %v950
        %952 = vmatmul.f32.gmra.mxu0 %v929
        %v953 = vpop.f32.mrf.mxu0
        %v954 = vadd.f32 0.0, %v953
        %955 = vdwg.mxu0
        %956 = vrot.lane.b32.xlu0 %v433, 64
        %v957 = vpop.permute.xlu0 %956
        %958 = vrot.lane.b32.xlu0 %v435, 64
        %v959 = vpop.permute.xlu0 %958
        %v960 = vsel %vm388, %v957, 0
        %v962 = vsel %vm388, %v959, 0
        %v964 = vsel %vm388, %v856, 0
        %966 = vmatpush.xpose.msra.mxu0 0.0
        %967 = vmatpush.xpose.msra.mxu0 0.0
        %968 = vmatpush.xpose.msra.mxu0 0.0
        %969 = vmatpush.xpose.msra.mxu0 0.0
        %970 = vmatpush.xpose.msra.mxu0 0.0
        %971 = vmatpush.xpose.msra.mxu0 0.0
        %972 = vmatpush.xpose.msra.mxu0 0.0
        %973 = vmatpush.xpose.msra.mxu0 0.0
        %974 = vmatpush.xpose.msra.mxu0 0.0
        %975 = vmatpush.xpose.msra.mxu0 0.0
        %976 = vmatpush.xpose.msra.mxu0 0.0
        %977 = vmatpush.xpose.msra.mxu0 0.0
        %978 = vmatpush.xpose.msra.mxu0 0.0
        %979 = vmatpush.xpose.msra.mxu0 0.0
        %980 = vmatpush.xpose.msra.mxu0 0.0
        %981 = vmatpush.xpose.msra.mxu0 %v964
        %982 = vmatmul.f32.gmra.mxu0 %v960
        %v983 = vpop.f32.mrf.mxu0
        %v984 = vadd.f32 0.0, %v983
        %985 = vmatmul.f32.gmra.mxu0 %v962
        %v986 = vpop.f32.mrf.mxu0
        %v987 = vadd.f32 0.0, %v986
        %988 = vdwg.mxu0
        %v989 = vmul.f32 %v885, 0.17677669
        %v990 = vmul.f32 %v888, 0.17677669
        %v991 = vmul.f32 %v918, 0.17677669
        %v992 = vmul.f32 %v921, 0.17677669
        %v993 = vmul.f32 %v951, 0.17677669
        %v994 = vmul.f32 %v954, 0.17677669
        %v995 = vmul.f32 %v984, 0.17677669
        %v996 = vmul.f32 %v987, 0.17677669
        %v997 = vsel %vm388, %v989, -inf
        %998 = vmax.xlane.f32.xlu0 %v997
        %v999 = vpop.xlane.xlu0 %998
        %v1000 = vsel %vm388, %v990, -inf
        %1001 = vmax.xlane.f32.xlu0 %v1000
        %v1002 = vpop.xlane.xlu0 %1001
        %v1003 = vsel %vm388, %v991, -inf
        %1004 = vmax.xlane.f32.xlu0 %v1003
        %v1005 = vpop.xlane.xlu0 %1004
        %v1006 = vsel %vm388, %v992, -inf
        %1007 = vmax.xlane.f32.xlu0 %v1006
        %v1008 = vpop.xlane.xlu0 %1007
        %v1009 = vsel %vm388, %v993, -inf
        %1010 = vmax.xlane.f32.xlu0 %v1009
        %v1011 = vpop.xlane.xlu0 %1010
        %v1012 = vsel %vm388, %v994, -inf
        %1013 = vmax.xlane.f32.xlu0 %v1012
        %v1014 = vpop.xlane.xlu0 %1013
        %v1015 = vsel %vm388, %v995, -inf
        %1016 = vmax.xlane.f32.xlu0 %v1015
        %v1017 = vpop.xlane.xlu0 %1016
        %v1018 = vsel %vm388, %v996, -inf
        %1019 = vmax.xlane.f32.xlu0 %v1018
        %v1020 = vpop.xlane.xlu0 %1019
        %v1021 = vsub.f32 %v989, %v999
        %v1022 = vsub.f32 %v990, %v1002
        %v1023 = vsub.f32 %v991, %v1005
        %v1024 = vsub.f32 %v992, %v1008
        %v1025 = vsub.f32 %v993, %v1011
        %v1026 = vsub.f32 %v994, %v1014
        %v1027 = vsub.f32 %v995, %v1017
        %v1028 = vsub.f32 %v996, %v1020
        %v1029 = vmul.f32 %v1021, 1.442695
        %v1030 = vpow.pop %v1029
        %v1031 = vmul.f32 %v1022, 1.442695
        %v1032 = vpow.pop %v1031
        %v1033 = vmul.f32 %v1023, 1.442695
        %v1034 = vpow.pop %v1033
        %v1035 = vmul.f32 %v1024, 1.442695
        %v1036 = vpow.pop %v1035
        %v1037 = vmul.f32 %v1025, 1.442695
        %v1038 = vpow.pop %v1037
        %v1039 = vmul.f32 %v1026, 1.442695
        %v1040 = vpow.pop %v1039
        %v1041 = vmul.f32 %v1027, 1.442695
        %v1042 = vpow.pop %v1041
        %v1043 = vmul.f32 %v1028, 1.442695
        %v1044 = vpow.pop %v1043
        %v1045 = vsel %vm388, %v1030, 0.0
        %1046 = vadd.xlane.f32.xlu0 %v1045
        %v1047 = vpop.xlane.xlu0 %1046
        %v1048 = vsel %vm388, %v1032, 0.0
        %1049 = vadd.xlane.f32.xlu0 %v1048
        %v1050 = vpop.xlane.xlu0 %1049
        %v1051 = vsel %vm388, %v1034, 0.0
        %1052 = vadd.xlane.f32.xlu0 %v1051
        %v1053 = vpop.xlane.xlu0 %1052
        %v1054 = vsel %vm388, %v1036, 0.0
        %1055 = vadd.xlane.f32.xlu0 %v1054
        %v1056 = vpop.xlane.xlu0 %1055
        %v1057 = vsel %vm388, %v1038, 0.0
        %1058 = vadd.xlane.f32.xlu0 %v1057
        %v1059 = vpop.xlane.xlu0 %1058
        %v1060 = vsel %vm388, %v1040, 0.0
        %1061 = vadd.xlane.f32.xlu0 %v1060
        %v1062 = vpop.xlane.xlu0 %1061
        %v1063 = vsel %vm388, %v1042, 0.0
        %1064 = vadd.xlane.f32.xlu0 %v1063
        %v1065 = vpop.xlane.xlu0 %1064
        %v1066 = vsel %vm388, %v1044, 0.0
        %1067 = vadd.xlane.f32.xlu0 %v1066
        %v1068 = vpop.xlane.xlu0 %1067
        %v1069 = vrcp.pop %v1047
        %v1070 = vmul.f32 %v1047, %v1069
        %v1071 = vsub.f32 1.0, %v1070
        %v1072 = vmul.f32 %v1069, %v1071
        %v1073 = vadd.f32 %v1069, %v1072
        %vm1074 = vweird.f32 %v1047
        %vm1075 = vweird.f32 %v1069
        %vm1076 = vmor %vm1074, %vm1075
        %v1077 = vsel %vm1076, %v1069, %v1073
        %v1078 = vand.u32 2147483647, %v1047
        %vm1079 = vcmp.eq.f32.partialorder %v1078, 8.507059e+37
        %v1080 = vand.u32 %v1047, 2147483648
        %v1081 = vor.u32 1.1754944e-38, %v1080
        %v1082 = vsel %vm1079, %v1081, %v1077
        %v1083 = vmul.f32 %v1030, %v1082
        %v1084 = vrcp.pop %v1050
        %v1085 = vmul.f32 %v1050, %v1084
        %v1086 = vsub.f32 1.0, %v1085
        %v1087 = vmul.f32 %v1084, %v1086
        %v1088 = vadd.f32 %v1084, %v1087
        %vm1089 = vweird.f32 %v1050
        %vm1090 = vweird.f32 %v1084
        %vm1091 = vmor %vm1089, %vm1090
        %v1092 = vsel %vm1091, %v1084, %v1088
        %v1093 = vand.u32 2147483647, %v1050
        %vm1094 = vcmp.eq.f32.partialorder %v1093, 8.507059e+37
        %v1095 = vand.u32 %v1050, 2147483648
        %v1096 = vor.u32 1.1754944e-38, %v1095
        %v1097 = vsel %vm1094, %v1096, %v1092
        %v1098 = vmul.f32 %v1032, %v1097
        %v1099 = vrcp.pop %v1053
        %v1100 = vmul.f32 %v1053, %v1099
        %v1101 = vsub.f32 1.0, %v1100
        %v1102 = vmul.f32 %v1099, %v1101
        %v1103 = vadd.f32 %v1099, %v1102
        %vm1104 = vweird.f32 %v1053
        %vm1105 = vweird.f32 %v1099
        %vm1106 = vmor %vm1104, %vm1105
        %v1107 = vsel %vm1106, %v1099, %v1103
        %v1108 = vand.u32 2147483647, %v1053
        %vm1109 = vcmp.eq.f32.partialorder %v1108, 8.507059e+37
        %v1110 = vand.u32 %v1053, 2147483648
        %v1111 = vor.u32 1.1754944e-38, %v1110
        %v1112 = vsel %vm1109, %v1111, %v1107
        %v1113 = vmul.f32 %v1034, %v1112
        %v1114 = vrcp.pop %v1056
        %v1115 = vmul.f32 %v1056, %v1114
        %v1116 = vsub.f32 1.0, %v1115
        %v1117 = vmul.f32 %v1114, %v1116
        %v1118 = vadd.f32 %v1114, %v1117
        %vm1119 = vweird.f32 %v1056
        %vm1120 = vweird.f32 %v1114
        %vm1121 = vmor %vm1119, %vm1120
        %v1122 = vsel %vm1121, %v1114, %v1118
        %v1123 = vand.u32 2147483647, %v1056
        %vm1124 = vcmp.eq.f32.partialorder %v1123, 8.507059e+37
        %v1125 = vand.u32 %v1056, 2147483648
        %v1126 = vor.u32 1.1754944e-38, %v1125
        %v1127 = vsel %vm1124, %v1126, %v1122
        %v1128 = vmul.f32 %v1036, %v1127
        %v1129 = vrcp.pop %v1059
        %v1130 = vmul.f32 %v1059, %v1129
        %v1131 = vsub.f32 1.0, %v1130
        %v1132 = vmul.f32 %v1129, %v1131
        %v1133 = vadd.f32 %v1129, %v1132
        %vm1134 = vweird.f32 %v1059
        %vm1135 = vweird.f32 %v1129
        %vm1136 = vmor %vm1134, %vm1135
        %v1137 = vsel %vm1136, %v1129, %v1133
        %v1138 = vand.u32 2147483647, %v1059
        %vm1139 = vcmp.eq.f32.partialorder %v1138, 8.507059e+37
        %v1140 = vand.u32 %v1059, 2147483648
        %v1141 = vor.u32 1.1754944e-38, %v1140
        %v1142 = vsel %vm1139, %v1141, %v1137
        %v1143 = vmul.f32 %v1038, %v1142
        %v1144 = vrcp.pop %v1062
        %v1145 = vmul.f32 %v1062, %v1144
        %v1146 = vsub.f32 1.0, %v1145
        %v1147 = vmul.f32 %v1144, %v1146
        %v1148 = vadd.f32 %v1144, %v1147
        %vm1149 = vweird.f32 %v1062
        %vm1150 = vweird.f32 %v1144
        %vm1151 = vmor %vm1149, %vm1150
        %v1152 = vsel %vm1151, %v1144, %v1148
        %v1153 = vand.u32 2147483647, %v1062
        %vm1154 = vcmp.eq.f32.partialorder %v1153, 8.507059e+37
        %v1155 = vand.u32 %v1062, 2147483648
        %v1156 = vor.u32 1.1754944e-38, %v1155
        %v1157 = vsel %vm1154, %v1156, %v1152
        %v1158 = vmul.f32 %v1040, %v1157
        %v1159 = vrcp.pop %v1065
        %v1160 = vmul.f32 %v1065, %v1159
        %v1161 = vsub.f32 1.0, %v1160
        %v1162 = vmul.f32 %v1159, %v1161
        %v1163 = vadd.f32 %v1159, %v1162
        %vm1164 = vweird.f32 %v1065
        %vm1165 = vweird.f32 %v1159
        %vm1166 = vmor %vm1164, %vm1165
        %v1167 = vsel %vm1166, %v1159, %v1163
        %v1168 = vand.u32 2147483647, %v1065
        %vm1169 = vcmp.eq.f32.partialorder %v1168, 8.507059e+37
        %v1170 = vand.u32 %v1065, 2147483648
        %v1171 = vor.u32 1.1754944e-38, %v1170
        %v1172 = vsel %vm1169, %v1171, %v1167
        %v1173 = vmul.f32 %v1042, %v1172
        %v1174 = vrcp.pop %v1068
        %v1175 = vmul.f32 %v1068, %v1174
        %v1176 = vsub.f32 1.0, %v1175
        %v1177 = vmul.f32 %v1174, %v1176
        %v1178 = vadd.f32 %v1174, %v1177
        %vm1179 = vweird.f32 %v1068
        %vm1180 = vweird.f32 %v1174
        %vm1181 = vmor %vm1179, %vm1180
        %v1182 = vsel %vm1181, %v1174, %v1178
        %v1183 = vand.u32 2147483647, %v1068
        %vm1184 = vcmp.eq.f32.partialorder %v1183, 8.507059e+37
        %v1185 = vand.u32 %v1068, 2147483648
        %v1186 = vor.u32 1.1754944e-38, %v1185
        %v1187 = vsel %vm1184, %v1186, %v1182
        %v1188 = vmul.f32 %v1044, %v1187
        %1189 = vrot.lane.b32.xlu0 %v842, 96
        %v1190 = vpop.permute.xlu0 %1189
        %v1193 = vsel %vm388, %v1083, 0
        %v1196 = vsel %vm388, %v1098, 0
        %1198 = vmatpush.msra.mxu0 0.0
        %1199 = vmatpush.msra.mxu0 0.0
        %1200 = vmatpush.msra.mxu0 0.0
        %1201 = vmatpush.msra.mxu0 0.0
        %1202 = vmatpush.msra.mxu0 0.0
        %1203 = vmatpush.msra.mxu0 0.0
        %1204 = vmatpush.msra.mxu0 0.0
        %1205 = vmatpush.msra.mxu0 0.0
        %1206 = vmatpush.msra.mxu0 0.0
        %1207 = vmatpush.msra.mxu0 0.0
        %1208 = vmatpush.msra.mxu0 0.0
        %1209 = vmatpush.msra.mxu0 0.0
        %1210 = vmatpush.msra.mxu0 0.0
        %1211 = vmatpush.msra.mxu0 0.0
        %1212 = vmatpush.msra.mxu0 0.0
        %1213 = vmatpush.msra.mxu0 %v1190
        %1214 = vmatmul.f32.gmra.mxu0 %v1193
        %v1215 = vpop.f32.mrf.mxu0
        %v1216 = vadd.f32 0.0, %v1215
        %1217 = vmatmul.f32.gmra.mxu0 %v1196
        %v1218 = vpop.f32.mrf.mxu0
        %v1219 = vadd.f32 0.0, %v1218
        %1220 = vdwg.mxu0
        %1221 = vrot.lane.b32.xlu0 %v852, 96
        %v1222 = vpop.permute.xlu0 %1221
        %v1225 = vsel %vm388, %v1113, 0
        %v1228 = vsel %vm388, %v1128, 0
        %1230 = vmatpush.msra.mxu0 0.0
        %1231 = vmatpush.msra.mxu0 0.0
        %1232 = vmatpush.msra.mxu0 0.0
        %1233 = vmatpush.msra.mxu0 0.0
        %1234 = vmatpush.msra.mxu0 0.0
        %1235 = vmatpush.msra.mxu0 0.0
        %1236 = vmatpush.msra.mxu0 0.0
        %1237 = vmatpush.msra.mxu0 0.0
        %1238 = vmatpush.msra.mxu0 0.0
        %1239 = vmatpush.msra.mxu0 0.0
        %1240 = vmatpush.msra.mxu0 0.0
        %1241 = vmatpush.msra.mxu0 0.0
        %1242 = vmatpush.msra.mxu0 0.0
        %1243 = vmatpush.msra.mxu0 0.0
        %1244 = vmatpush.msra.mxu0 0.0
        %1245 = vmatpush.msra.mxu0 %v1222
        %1246 = vmatmul.f32.gmra.mxu0 %v1225
        %v1247 = vpop.f32.mrf.mxu0
        %v1248 = vadd.f32 0.0, %v1247
        %1249 = vmatmul.f32.gmra.mxu0 %v1228
        %v1250 = vpop.f32.mrf.mxu0
        %v1251 = vadd.f32 0.0, %v1250
        %1252 = vdwg.mxu0
        %1253 = vrot.lane.b32.xlu0 %v854, 96
        %v1254 = vpop.permute.xlu0 %1253
        %v1257 = vsel %vm388, %v1143, 0
        %v1260 = vsel %vm388, %v1158, 0
        %1262 = vmatpush.msra.mxu0 0.0
        %1263 = vmatpush.msra.mxu0 0.0
        %1264 = vmatpush.msra.mxu0 0.0
        %1265 = vmatpush.msra.mxu0 0.0
        %1266 = vmatpush.msra.mxu0 0.0
        %1267 = vmatpush.msra.mxu0 0.0
        %1268 = vmatpush.msra.mxu0 0.0
        %1269 = vmatpush.msra.mxu0 0.0
        %1270 = vmatpush.msra.mxu0 0.0
        %1271 = vmatpush.msra.mxu0 0.0
        %1272 = vmatpush.msra.mxu0 0.0
        %1273 = vmatpush.msra.mxu0 0.0
        %1274 = vmatpush.msra.mxu0 0.0
        %1275 = vmatpush.msra.mxu0 0.0
        %1276 = vmatpush.msra.mxu0 0.0
        %1277 = vmatpush.msra.mxu0 %v1254
        %1278 = vmatmul.f32.gmra.mxu0 %v1257
        %v1279 = vpop.f32.mrf.mxu0
        %v1280 = vadd.f32 0.0, %v1279
        %1281 = vmatmul.f32.gmra.mxu0 %v1260
        %v1282 = vpop.f32.mrf.mxu0
        %v1283 = vadd.f32 0.0, %v1282
        %1284 = vdwg.mxu0
        %1285 = vrot.lane.b32.xlu0 %v856, 96
        %v1286 = vpop.permute.xlu0 %1285
        %v1289 = vsel %vm388, %v1173, 0
        %v1292 = vsel %vm388, %v1188, 0
        %1294 = vmatpush.msra.mxu0 0.0
        %1295 = vmatpush.msra.mxu0 0.0
        %1296 = vmatpush.msra.mxu0 0.0
        %1297 = vmatpush.msra.mxu0 0.0
        %1298 = vmatpush.msra.mxu0 0.0
        %1299 = vmatpush.msra.mxu0 0.0
        %1300 = vmatpush.msra.mxu0 0.0
        %1301 = vmatpush.msra.mxu0 0.0
        %1302 = vmatpush.msra.mxu0 0.0
        %1303 = vmatpush.msra.mxu0 0.0
        %1304 = vmatpush.msra.mxu0 0.0
        %1305 = vmatpush.msra.mxu0 0.0
        %1306 = vmatpush.msra.mxu0 0.0
        %1307 = vmatpush.msra.mxu0 0.0
        %1308 = vmatpush.msra.mxu0 0.0
        %1309 = vmatpush.msra.mxu0 %v1286
        %1310 = vmatmul.f32.gmra.mxu0 %v1289
        %v1311 = vpop.f32.mrf.mxu0
        %v1312 = vadd.f32 0.0, %v1311
        %1313 = vmatmul.f32.gmra.mxu0 %v1292
        %v1314 = vpop.f32.mrf.mxu0
        %v1315 = vadd.f32 0.0, %v1314
        %1316 = vdwg.mxu0
        %1325 = vrot.lane.b32.xlu0 %v1216, 64
        %v1326 = vpop.permute.xlu0 %1325
        %1327 = vrot.lane.b32.xlu0 %v1219, 64
        %v1328 = vpop.permute.xlu0 %1327
        %1329 = vrot.lane.b32.xlu0 %v1248, 64
        %v1330 = vpop.permute.xlu0 %1329
        %1331 = vrot.lane.b32.xlu0 %v1251, 64
        %v1332 = vpop.permute.xlu0 %1331
        %1333 = vrot.lane.b32.xlu0 %v1280, 64
        %v1334 = vpop.permute.xlu0 %1333
        %1335 = vrot.lane.b32.xlu0 %v1283, 64
        %v1336 = vpop.permute.xlu0 %1335
        %1337 = vrot.lane.b32.xlu0 %v1312, 64
        %v1338 = vpop.permute.xlu0 %1337
        %1339 = vrot.lane.b32.xlu0 %v1315, 64
        %v1340 = vpop.permute.xlu0 %1339
        %v1349 = vadd.f32 %v413, %v1326
        %v1350 = vadd.f32 %v416, %v1328
        %v1351 = vadd.f32 %v425, %v1330
        %v1352 = vadd.f32 %v427, %v1332
        %v1353 = vadd.f32 %v429, %v1334
        %v1354 = vadd.f32 %v431, %v1336
        %v1355 = vadd.f32 %v433, %v1338
        %v1356 = vadd.f32 %v435, %v1340
        %1359 = vrot.lane.b32.xlu0 %v1349, 64
        %v1360 = vpop.permute.xlu0 %1359
        %1361 = vrot.lane.b32.xlu0 %v1350, 64
        %v1362 = vpop.permute.xlu0 %1361
        %1367 = vrot.lane.b32.xlu0 %v1351, 72
        %v1368 = vpop.permute.xlu0 %1367
        %1369 = vrot.lane.b32.xlu0 %v1352, 72
        %v1370 = vpop.permute.xlu0 %1369
        %1375 = vrot.lane.b32.xlu0 %v1353, 80
        %v1376 = vpop.permute.xlu0 %1375
        %1377 = vrot.lane.b32.xlu0 %v1354, 80
        %v1378 = vpop.permute.xlu0 %1377
        %1383 = vrot.lane.b32.xlu0 %v1355, 88
        %v1384 = vpop.permute.xlu0 %1383
        %1385 = vrot.lane.b32.xlu0 %v1356, 88
        %v1386 = vpop.permute.xlu0 %1385
        %v1389 = vsel %vm388, %v1360, %v1368
        %v1390 = vsel %vm388, %v1362, %v1370
        %v1391 = vsel %vm548, %v1389, %v1376
        %v1392 = vsel %vm548, %v1390, %v1378
        %v1393 = vsel %vm779, %v1391, %v1384
        %v1394 = vsel %vm779, %v1392, %v1386
        %v1395 = vld [vmem:[%s8 + $0x1] sm:$0x1]
        %v1396 = vld [vmem:[#allocation7] sm:$0xff]
        %v1397 = vld [vmem:[#allocation7 + $0x8] sm:$0xff]
        %v1398 = vld [vmem:[#allocation7 + $0x10] sm:$0xff]
        %v1399 = vld [vmem:[#allocation7 + $0x18] sm:$0xff]
        %v1400 = vperm.slane %v1395, 0
        %v1402 = vsel %vm787, %v1393, 0
        %v1405 = vsel %vm787, %v1394, 0
        %1407 = vmatpush.msra.mxu0 0.0
        %1408 = vmatpush.msra.mxu0 0.0
        %1409 = vmatpush.msra.mxu0 0.0
        %1410 = vmatpush.msra.mxu0 0.0
        %1411 = vmatpush.msra.mxu0 0.0
        %1412 = vmatpush.msra.mxu0 0.0
        %1413 = vmatpush.msra.mxu0 0.0
        %1414 = vmatpush.msra.mxu0 0.0
        %1415 = vmatpush.msra.mxu0 0.0
        %1416 = vmatpush.msra.mxu0 0.0
        %1417 = vmatpush.msra.mxu0 0.0
        %1418 = vmatpush.msra.mxu0 0.0
        %1419 = vmatpush.msra.mxu0 %v1399
        %1420 = vmatpush.msra.mxu0 %v1398
        %1421 = vmatpush.msra.mxu0 %v1397
        %1422 = vmatpush.msra.mxu0 %v1396
        %1423 = vmatmul.f32.gmra.mxu0 %v1402
        %v1424 = vpop.f32.mrf.mxu0
        %v1425 = vadd.f32 %v1400, %v1424
        %1426 = vmatmul.f32.gmra.mxu0 %v1405
        %v1427 = vpop.f32.mrf.mxu0
        %v1428 = vadd.f32 %v1400, %v1427
        %1429 = vdwg.mxu0
        %v1430 = vmax.f32 %v1425, 0.0
        %v1431 = vmax.f32 %v1428, 0.0
        %v1432 = vadd.f32 %v1393, %v1430
        %v1433 = vadd.f32 %v1394, %v1431
        %1434 = vst.msk [vmem:[%s375] sm:$0xff] %vm787, %v1432
        %1435 = vst.msk [vmem:[%s375 + $0x8] sm:$0xff] %vm787, %v1433
        %s1436 = sand.u32 %s227, 1
        %s1437 = scalar_lea.sflag [#allocation4], %s1436
        %s1438 = sand.u32 %s227, 1
        %s1439 = smul.addr %s1438, 16
        %s1440 = scalar_lea.vmem [#allocation8], %s1439
        // Predicated region
        $region69: #{tpu_custom_call.1} parent=55 // pred_check
          %p1441 = pneg %p237
        $region70: #{tpu_custom_call.1} parent=55 // pred_check_branch
          %1443 = sbr.rel (%p1441) target = $region72
        $region71: #{tpu_custom_call.1} parent=55 // pred_region
          %1445 = vsyncadd %s1437, 0
          %s1446 = smul.addr %s25, 2
          %s1447 = smul.addr %s1446, 8
          %s1448 = scalar_lea.hbm %s9, %s1447
          %s1449 = sshll.u32 %s1440, 4
          %s1450 = int_to_ptr.vmem [resolvable:$true] %s1449
          %s1451 = sshll.u32 %s1448, 4
          %s1452 = int_to_ptr.hbm [resolvable:$true] %s1451
          %1457 = dma.vmem_to_hbm [thread:$0]  %s1450, 256, %s1452, %s1437, 128, 128, 8
        $region72: #{tpu_custom_call.1} parent=55 // pred_fallthru
          _
      $region56: #{tpu_custom_call.1} parent=5 // pred_fallthru
        _
      %p1458 = scmp.le.s32.totalorder 2, %s20
      // Predicated region
      $region73: #{tpu_custom_call.1} parent=5 // pred_check
        %p1459 = pneg %p1458
      $region74: #{tpu_custom_call.1} parent=5 // pred_check_branch
        %1461 = sbr.rel (%p1459) target = $region76
      $region75: #{tpu_custom_call.1} parent=5 // pred_region
        %s1462 = ssub.s32 %s20, 2
        // Predicated region
        $region77: #{tpu_custom_call.1} parent=75 // pred_check
          %p1463 = pneg %p243
        $region78: #{tpu_custom_call.1} parent=75 // pred_check_branch
          %1465 = sbr.rel (%p1463) target = $region80
        $region79: #{tpu_custom_call.1} parent=75 // pred_region
          %s1466 = sand.u32 %s228, 1
          %s1467 = scalar_lea.sflag [#allocation4], %s1466
          %s1468 = sand.u32 %s228, 1
          %s1469 = smul.addr %s1468, 16
          %s1470 = scalar_lea.vmem [#allocation8], %s1469
          %1472 = dma.done %s1467, 256
        $region80: #{tpu_custom_call.1} parent=75 // pred_fallthru
          _
      $region76: #{tpu_custom_call.1} parent=5 // pred_fallthru
        _
    $region6: #{tpu_custom_call.1} parent=1 // loop_footer
      %s24 = sadd.s32 1, %s20
    $region7: #{tpu_custom_call.1} parent=1 // loop_footer_branch
      %19 = sbr.rel target = $region3
    $region8: #{tpu_custom_call.1} parent=1 // loop_exit
      _
    %1473 = vsyncpa [#allocation3], 1
    %s1474 = scalar_lea.sflag [#allocation3], 1
    %1475 = vsyncpa %s1474, 1
    %1476 = vsyncpa [#allocation6], 1
    %1477 = vsyncpa [#allocation4], 1
    %s1478 = scalar_lea.sflag [#allocation4], 1
    %1479 = vsyncpa %s1478, 1

</llo_original>
